<compile_context>
chip_gen: v7x
topology: tpu7x:2x2x1
jax: 0.10.0
libtpu: 0.0.40
codegen_flags: <defaults>
</compile_context>

<pallas_src>
import math

import jax
import jax.numpy as jnp
from jax import lax
from jax.experimental import pallas as pl
from jax.experimental.pallas import tpu as pltpu

TEMP = 0.5      # self.temp
LAMBDA = 0.2    # self.lambda_
EPS = 1e-8
LANE = 128
NEG_INF = -1e30
# exp(<p,p>/(||p||^2 * temp)) == exp(1/temp) exactly — replaces the computed
# self-similarity term on the (2B,2B) diagonal.
SELF_SIM = math.exp(1.0 / TEMP)


def _round_up(x, m):
    return (x + m - 1) // m * m


def _pick_tile(d, tk):
    """Largest lane-aligned D-tile <= tk that divides D (falls back to full D
    as a single tile, which satisfies the full-extent BlockSpec rule)."""
    tk = min(tk, d)
    if d % tk == 0 and (tk % LANE == 0 or tk == d):
        return tk
    t = (tk // LANE) * LANE
    while t >= LANE:
        if d % t == 0:
            return t
        t -= LANE
    return d


# ----------------------------------------------------------------------------
# One-time parameter packing (cached across training steps — NOT per call).
# ----------------------------------------------------------------------------
def fuse_params(w_proj, b_proj, w_cls, b_cls):
    """Pack both heads into one lane group: proj -> lanes [0,P), class logits
    -> lanes [P,P+K), remaining lanes zero.  Weight stored bf16 (halves the
    HBM weight stream, the binding resource); bias stays f32 (added after the
    f32 accumulation)."""
    D, P = w_proj.shape
    K = w_cls.shape[1]
    npad = _round_up(P + K, LANE)        # single 128-lane group when P+K <= 128
    w = jnp.zeros((D, npad), jnp.float32)
    w = w.at[:, :P].set(w_proj).at[:, P:P + K].set(w_cls)
    b = jnp.zeros((1, npad), jnp.float32)
    b = b.at[:, :P].set(b_proj.reshape(1, P)).at[:, P:P + K].set(b_cls.reshape(1, K))
    # TODO(synk): for very narrow heads a pre-transposed (P+K, D) bf16 weight
    # (D on the lane axis) would cut streamed bytes another ~2.7x; not needed
    # at the current 2x win from single-lane-group packing.
    return w.astype(jnp.bfloat16), b, P, K, npad


# ----------------------------------------------------------------------------
# Fused kernel: D-tiled matmul for both views + USCL loss at finalize.
# ----------------------------------------------------------------------------
def _make_kernel(P, K, npad):
    def kernel(xi_ref, xj_ref, w_ref, b_ref, y_ref, out_ref, acc_i, acc_j):
        k = pl.program_id(0)

        @pl.when(k == 0)
        def _init():
            acc_i[...] = jnp.zeros_like(acc_i)
            acc_j[...] = jnp.zeros_like(acc_j)

        # Stream each bf16 fused-weight tile ONCE; both views reuse it (halves
        # weight HBM traffic vs. two net passes).  Activations arrive f32 (no
        # wrapper-side cast op) and are cast to bf16 on the VPU here; the MXU
        # accumulates in f32.
        w = w_ref[...]
        acc_i[...] += jnp.dot(xi_ref[...].astype(jnp.bfloat16), w,
                              preferred_element_type=jnp.float32)
        acc_j[...] += jnp.dot(xj_ref[...].astype(jnp.bfloat16), w,
                              preferred_element_type=jnp.float32)

        @pl.when(k == pl.num_programs(0) - 1)
        def _finalize():
            b = b_ref[...]                       # (1, npad) f32
            hi = acc_i[...] + b                  # (B, npad): proj | cls | zeros
            hj = acc_j[...] + b
            nb = hi.shape[0]
            cols = lax.broadcasted_iota(jnp.int32, (nb, npad), 1)
            proj_mask = cols < P                 # proj head lanes

            # ---------------- unsupervised InfoNCE ----------------
            # Normalize with 1/temp folded into the per-row scale: the
            # similarity then needs no outer-product divide and no /temp.
            def normalize(h):
                p = jnp.where(proj_mask, h, 0.0)
                n2 = jnp.sum(p * p, axis=-1, keepdims=True)
                return p * (1.0 / jnp.sqrt(n2 * TEMP))

            pi = normalize(hi)                   # (B, npad), cls lanes zeroed
            pj = normalize(hj)

            # dot_general contracting last dims == p @ p.T without an explicit
            # transpose (XLU relayout avoided).
            dims = (((1,), (1,)), ((), ()))
            e_ii = jnp.exp(lax.dot_general(pi, pi, dims,
                                           preferred_element_type=jnp.float32))
            e_ij = jnp.exp(lax.dot_general(pi, pj, dims,
                                           preferred_element_type=jnp.float32))
            e_ji = jnp.exp(lax.dot_general(pj, pi, dims,
                                           preferred_element_type=jnp.float32))
            e_jj = jnp.exp(lax.dot_general(pj, pj, dims,
                                           preferred_element_type=jnp.float32))
            # TODO(synk): at large contrastive B, drop e_ji (== e_ij.T) and use
            # column sums of e_ij to shave one (B,B) MXU op + exp chain.

            # Diagonal (self) term removed with the exact constant exp(1/temp).
            row_sum_i = (jnp.sum(e_ii, axis=-1, keepdims=True)
                         + jnp.sum(e_ij, axis=-1, keepdims=True) - SELF_SIM)
            row_sum_j = (jnp.sum(e_jj, axis=-1, keepdims=True)
                         + jnp.sum(e_ji, axis=-1, keepdims=True) - SELF_SIM)

            # Positive pair (i, i+B) == (i+B, i): row-wise dot of the views.
            pos = jnp.exp(jnp.sum(pi * pj, axis=-1, keepdims=True))      # (B,1)

            unsup_rows = (-jnp.log(pos / row_sum_i + EPS)
                          - jnp.log(pos / row_sum_j + EPS))              # (B,1)
            unsup = jnp.sum(unsup_rows, axis=0, keepdims=True) / (2 * nb)  # (1,1)

            # ---------------- supervised cross-entropy ----------------
            # Class logits live in lanes [P, P+K); mask the log-sum-exp there.
            cls_mask = jnp.logical_and(cols >= P, cols < P + K)
            y = y_ref[...]                        # (B, 1) int32
            onehot = (cols == (y + P)).astype(jnp.float32)

            def ce(h):                            # h: (B, npad) f32
                hm = jnp.where(cls_mask, h, NEG_INF)
                m = jnp.max(hm, axis=-1, keepdims=True)
                z = jnp.sum(jnp.exp(hm - m), axis=-1, keepdims=True)
                lse = jnp.log(z) + m
                tgt = jnp.sum(onehot * h, axis=-1, keepdims=True)
                return jnp.sum(lse - tgt, axis=0, keepdims=True) / nb    # (1,1)

            sup = ce(hi) + ce(hj)

            # use_sup_loss and use_unsup_loss both True -> unsup + lambda*sup
            out_ref[...] = unsup + LAMBDA * sup

    return kernel


# ----------------------------------------------------------------------------
# Wrapper: one pallas_call, D tiled on the grid (reduction axis, "arbitrary").
# ----------------------------------------------------------------------------
def uscl_forward(x, xi, xj, y, fused_params, *, tk=2048):
    """fused_params = fuse_params(...) computed ONCE and reused every step."""
    w_bf, b_f32, P, K, npad = fused_params
    del x  # only contributes the batch size, same as xi
    B = xi.shape[0]
    D = w_bf.shape[0]

    # Row-major NCHW flatten is a view; activations stay f32 (cast happens
    # in-kernel), so there are no standalone per-call XLA ops before the kernel.
    xi_flat = xi.reshape(B, D)
    xj_flat = xj.reshape(B, D)
    y2 = y.reshape(B, 1).astype(jnp.int32)

    t = _pick_tile(D, tk)
    grid = (D // t,)

    kernel = _make_kernel(P, K, npad)
    out = pl.pallas_call(
        kernel,
        out_shape=jax.ShapeDtypeStruct((1, 1), jnp.float32),
        grid_spec=pltpu.PrefetchScalarGridSpec(
            num_scalar_prefetch=0,
            grid=grid,
            in_specs=[
                pl.BlockSpec((B, t), lambda k: (0, k)),       # xi D-tile (f32)
                pl.BlockSpec((B, t), lambda k: (0, k)),       # xj D-tile (f32)
                pl.BlockSpec((t, npad), lambda k: (k, 0)),    # fused bf16 weight tile
                pl.BlockSpec((1, npad), lambda k: (0, 0)),    # fused bias (resident)
                pl.BlockSpec((B, 1), lambda k: (0, 0)),       # labels (resident)
            ],
            out_specs=pl.BlockSpec((1, 1), lambda k: (0, 0)),
            scratch_shapes=[
                pltpu.VMEM((B, npad), jnp.float32),           # accumulator view i
                pltpu.VMEM((B, npad), jnp.float32),           # accumulator view j
            ],
        ),
        compiler_params=pltpu.CompilerParams(
            # Single contraction axis -> sequential.
            # TODO(synk): on v7x add a leading size-2 "parallel" axis splitting
            # the D reduction across the two TensorCores (per-core partials +
            # tiny epilogue) so both cores' HBM pull is used.
            dimension_semantics=("arbitrary",),
            vmem_limit_bytes=32 * 1024 * 1024,
        ),
    )(xi_flat, xj_flat, w_bf, b_f32, y2)
    return out[0, 0]


# ----------------------------------------------------------------------------
# Pure-JAX reference mirroring the PyTorch USCLloss.forward, evaluated on the
# same bf16-rounded activations/weights the kernel consumes (f32 math after).
# ----------------------------------------------------------------------------
def _reference(x, xi, xj, y, params):
    w_proj, b_proj, w_cls, b_cls = params
    B = x.shape[0]
    D = w_proj.shape[0]
    r = lambda a: a.astype(jnp.bfloat16).astype(jnp.float32)

    def net(a):
        a = r(a.reshape(B, D))
        return a @ r(w_proj) + b_proj, a @ r(w_cls) + b_cls

    proj_i, dig_i = net(xi)
    proj_j, dig_j = net(xj)
    proj = jnp.concatenate([proj_i, proj_j], axis=0)
    norm = jnp.linalg.norm(proj, axis=-1, keepdims=True)
    cos_sim = proj @ proj.T / (norm @ norm.T)
    cos_sim = jnp.exp(cos_sim / TEMP)
    cos_sim = cos_sim * (1.0 - jnp.eye(proj.shape[0]))

    def info_nce(i, j):
        return -jnp.log(cos_sim[i, j] / jnp.sum(cos_sim[i, :]) + EPS)

    unsup = 0.0
    for i in range(B):
        unsup += info_nce(i, i + B)
        unsup += info_nce(i + B, i)
    unsup = unsup / proj.shape[0]

    def ce(d):
        logp = jax.nn.log_softmax(d, axis=-1)
        return -jnp.mean(logp[jnp.arange(B), y])

    sup = ce(dig_i) + ce(dig_j)
    return unsup + LAMBDA * sup


if __name__ == "__main__":
    key = jax.random.PRNGKey(0)
    B, C, H, W = 2, 4, 16, 16
    P, K = 32, 4
    D = C * H * W

    k1, k2, k3, k4, k5, k6 = jax.random.split(key, 6)
    x = jax.random.normal(k1, (B, C, H, W), jnp.float32)    # only batch size used
    xi = jax.random.normal(k2, (B, C, H, W), jnp.float32)
    xj = jax.random.normal(k3, (B, C, H, W), jnp.float32)
    y = jax.random.randint(k4, (B,), 0, K)

    # deterministic synthetic net parameters (linear -> (proj, digits))
    w_proj = jax.random.normal(k5, (D, P), jnp.float32) * 0.02
    b_proj = jnp.zeros((1, P), jnp.float32)
    w_cls = jax.random.normal(k6, (D, K), jnp.float32) * 0.02
    b_cls = jnp.zeros((1, K), jnp.float32)

    # One-time packing (amortized across all training steps).
    fused = fuse_params(w_proj, b_proj, w_cls, b_cls)

    loss = uscl_forward(x, xi, xj, y, fused)
    jax.block_until_ready(loss)

    ref = _reference(x, xi, xj, y, (w_proj, b_proj, w_cls, b_cls))
    assert jnp.allclose(loss, ref, rtol=1e-4, atol=1e-4), (loss, ref)

    # TODO(synk): wandb.log side effect from the PyTorch module is intentionally
    # omitted (no numerical effect on the returned loss).
    print("KERNEL_OK")
</pallas_src>

<mosaic_0001>
module attributes {stable_mosaic.version = 11 : i64} {
  func.func @kernel(%arg0: i32, %arg1: memref<2x1024xf32, #tpu.memory_space<vmem>>, %arg2: memref<2x1024xf32, #tpu.memory_space<vmem>>, %arg3: memref<1024x128xbf16, #tpu.memory_space<vmem>>, %arg4: memref<1x128xf32, #tpu.memory_space<vmem>>, %arg5: memref<2x1xi32, #tpu.memory_space<vmem>>, %arg6: memref<1x1xf32, #tpu.memory_space<vmem>>, %arg7: memref<2x128xf32, #tpu.memory_space<vmem>>, %arg8: memref<2x128xf32, #tpu.memory_space<vmem>>) attributes {dimension_semantics = [#tpu.dimension_semantics<arbitrary>], iteration_bounds = array<i64: 1>, scalar_prefetch = 0 : i64, scratch_operands = 2 : i64, tpu.core_type = #tpu.core_type<tc>, window_params = [{transform_indices = @transform_0, window_bounds = array<i64: 2, 1024>}, {transform_indices = @transform_1, window_bounds = array<i64: 2, 1024>}, {transform_indices = @transform_2, window_bounds = array<i64: 1024, 128>}, {pipeline_mode = #tpu.pipeline_mode<synchronous>, transform_indices = @transform_3, window_bounds = array<i64: 1, 128>}, {pipeline_mode = #tpu.pipeline_mode<synchronous>, transform_indices = @transform_4, window_bounds = array<i64: 2, 1>}, {pipeline_mode = #tpu.pipeline_mode<synchronous>, transform_indices = @transform_5, window_bounds = array<i64: 1, 1>}]} {
    %c0_i32 = arith.constant 0 : i32
    %0 = arith.cmpi eq, %arg0, %c0_i32 : i32
    %1 = arith.extui %0 : i1 to i32
    %c0_i32_0 = arith.constant 0 : i32
    %2 = arith.cmpi ne, %1, %c0_i32_0 : i32
    scf.if %2 {
      %cst_17 = arith.constant 0.000000e+00 : f32
      %19 = vector.broadcast %cst_17 : f32 to vector<2x128xf32>
      %c0_18 = arith.constant 0 : index
      %c0_19 = arith.constant 0 : index
      %20 = vector.load %arg7[%c0_18, %c0_19] : memref<2x128xf32, #tpu.memory_space<vmem>>, vector<2x128xf32>
      tpu.vector_store %arg7[%c0_18, %c0_19], %19 {strides = array<i32>} : memref<2x128xf32, #tpu.memory_space<vmem>>, vector<2x128xf32>,
      %cst_20 = arith.constant 0.000000e+00 : f32
      %21 = vector.broadcast %cst_20 : f32 to vector<2x128xf32>
      %c0_21 = arith.constant 0 : index
      %c0_22 = arith.constant 0 : index
      %22 = vector.load %arg8[%c0_21, %c0_22] : memref<2x128xf32, #tpu.memory_space<vmem>>, vector<2x128xf32>
      tpu.vector_store %arg8[%c0_21, %c0_22], %21 {strides = array<i32>} : memref<2x128xf32, #tpu.memory_space<vmem>>, vector<2x128xf32>,
    } else {
    }
    %c0 = arith.constant 0 : index
    %c0_1 = arith.constant 0 : index
    %3 = vector.load %arg3[%c0, %c0_1] : memref<1024x128xbf16, #tpu.memory_space<vmem>>, vector<1024x128xbf16>
    %c0_2 = arith.constant 0 : index
    %c0_3 = arith.constant 0 : index
    %4 = vector.load %arg7[%c0_2, %c0_3] : memref<2x128xf32, #tpu.memory_space<vmem>>, vector<2x128xf32>
    %c0_4 = arith.constant 0 : index
    %c0_5 = arith.constant 0 : index
    %5 = vector.load %arg1[%c0_4, %c0_5] : memref<2x1024xf32, #tpu.memory_space<vmem>>, vector<2x1024xf32>
    %6 = arith.truncf %5 : vector<2x1024xf32> to vector<2x1024xbf16>
    %cst = arith.constant dense<0.000000e+00> : vector<2x128xf32>
    %7 = tpu.matmul %6, %3, %cst {dimension_numbers = #tpu.dot_dimension_numbers<[1], [0], [0], [1], [0, 0, 1, 1], [], []>} : vector<2x1024xbf16>, vector<1024x128xbf16>, vector<2x128xf32> -> vector<2x128xf32>
    %8 = arith.addf %4, %7 : vector<2x128xf32>
    %c0_6 = arith.constant 0 : index
    %c0_7 = arith.constant 0 : index
    %9 = vector.load %arg7[%c0_6, %c0_7] : memref<2x128xf32, #tpu.memory_space<vmem>>, vector<2x128xf32>
    tpu.vector_store %arg7[%c0_6, %c0_7], %8 {strides = array<i32>} : memref<2x128xf32, #tpu.memory_space<vmem>>, vector<2x128xf32>,
    %c0_8 = arith.constant 0 : index
    %c0_9 = arith.constant 0 : index
    %10 = vector.load %arg8[%c0_8, %c0_9] : memref<2x128xf32, #tpu.memory_space<vmem>>, vector<2x128xf32>
    %c0_10 = arith.constant 0 : index
    %c0_11 = arith.constant 0 : index
    %11 = vector.load %arg2[%c0_10, %c0_11] : memref<2x1024xf32, #tpu.memory_space<vmem>>, vector<2x1024xf32>
    %12 = arith.truncf %11 : vector<2x1024xf32> to vector<2x1024xbf16>
    %cst_12 = arith.constant dense<0.000000e+00> : vector<2x128xf32>
    %13 = tpu.matmul %12, %3, %cst_12 {dimension_numbers = #tpu.dot_dimension_numbers<[1], [0], [0], [1], [0, 0, 1, 1], [], []>} : vector<2x1024xbf16>, vector<1024x128xbf16>, vector<2x128xf32> -> vector<2x128xf32>
    %14 = arith.addf %10, %13 : vector<2x128xf32>
    %c0_13 = arith.constant 0 : index
    %c0_14 = arith.constant 0 : index
    %15 = vector.load %arg8[%c0_13, %c0_14] : memref<2x128xf32, #tpu.memory_space<vmem>>, vector<2x128xf32>
    tpu.vector_store %arg8[%c0_13, %c0_14], %14 {strides = array<i32>} : memref<2x128xf32, #tpu.memory_space<vmem>>, vector<2x128xf32>,
    %c0_i32_15 = arith.constant 0 : i32
    %16 = arith.cmpi eq, %arg0, %c0_i32_15 : i32
    %17 = arith.extui %16 : i1 to i32
    %c0_i32_16 = arith.constant 0 : i32
    %18 = arith.cmpi ne, %17, %c0_i32_16 : i32
    scf.if %18 {
      %c0_17 = arith.constant 0 : index
      %c0_18 = arith.constant 0 : index
      %19 = vector.load %arg4[%c0_17, %c0_18] : memref<1x128xf32, #tpu.memory_space<vmem>>, vector<1x128xf32>
      %c0_19 = arith.constant 0 : index
      %c0_20 = arith.constant 0 : index
      %20 = vector.load %arg7[%c0_19, %c0_20] : memref<2x128xf32, #tpu.memory_space<vmem>>, vector<2x128xf32>
      %21 = vector.broadcast %19 : vector<1x128xf32> to vector<2x128xf32>
      %22 = arith.addf %20, %21 : vector<2x128xf32>
      %c0_21 = arith.constant 0 : index
      %c0_22 = arith.constant 0 : index
      %23 = vector.load %arg8[%c0_21, %c0_22] : memref<2x128xf32, #tpu.memory_space<vmem>>, vector<2x128xf32>
      %24 = vector.broadcast %19 : vector<1x128xf32> to vector<2x128xf32>
      %25 = arith.addf %23, %24 : vector<2x128xf32>
      %26 = tpu.iota {dimensions = array<i32: 1>} : vector<2x128xi32>
      %c32_i32 = arith.constant 32 : i32
      %27 = vector.broadcast %c32_i32 : i32 to vector<2x128xi32>
      %28 = arith.cmpi slt, %26, %27 : vector<2x128xi32>
      %cst_23 = arith.constant 0.000000e+00 : f32
      %29 = vector.broadcast %cst_23 : f32 to vector<2x128xf32>
      %30 = arith.select %28, %22, %29 : vector<2x128xi1>, vector<2x128xf32>
      %31 = arith.mulf %30, %30 : vector<2x128xf32>
      %cst_24 = arith.constant dense<0.000000e+00> : vector<2xf32>
      %32 = vector.multi_reduction <add>, %31, %cst_24 [1] : vector<2x128xf32> to vector<2xf32>
      %33 = vector.shape_cast %32 : vector<2xf32> to vector<2x1xf32>
      %cst_25 = arith.constant 5.000000e-01 : f32
      %34 = vector.broadcast %cst_25 : f32 to vector<2x1xf32>
      %35 = arith.mulf %33, %34 : vector<2x1xf32>
      %36 = math.sqrt %35 : vector<2x1xf32>
      %cst_26 = arith.constant 1.000000e+00 : f32
      %37 = vector.broadcast %cst_26 : f32 to vector<2x1xf32>
      %38 = arith.divf %37, %36 : vector<2x1xf32>
      %39 = vector.broadcast %38 : vector<2x1xf32> to vector<2x128xf32>
      %40 = arith.mulf %30, %39 : vector<2x128xf32>
      %cst_27 = arith.constant 0.000000e+00 : f32
      %41 = vector.broadcast %cst_27 : f32 to vector<2x128xf32>
      %42 = arith.select %28, %25, %41 : vector<2x128xi1>, vector<2x128xf32>
      %43 = arith.mulf %42, %42 : vector<2x128xf32>
      %cst_28 = arith.constant dense<0.000000e+00> : vector<2xf32>
      %44 = vector.multi_reduction <add>, %43, %cst_28 [1] : vector<2x128xf32> to vector<2xf32>
      %45 = vector.shape_cast %44 : vector<2xf32> to vector<2x1xf32>
      %cst_29 = arith.constant 5.000000e-01 : f32
      %46 = vector.broadcast %cst_29 : f32 to vector<2x1xf32>
      %47 = arith.mulf %45, %46 : vector<2x1xf32>
      %48 = math.sqrt %47 : vector<2x1xf32>
      %cst_30 = arith.constant 1.000000e+00 : f32
      %49 = vector.broadcast %cst_30 : f32 to vector<2x1xf32>
      %50 = arith.divf %49, %48 : vector<2x1xf32>
      %51 = vector.broadcast %50 : vector<2x1xf32> to vector<2x128xf32>
      %52 = arith.mulf %42, %51 : vector<2x128xf32>
      %cst_31 = arith.constant dense<0.000000e+00> : vector<2x2xf32>
      %53 = tpu.matmul %40, %40, %cst_31 {dimension_numbers = #tpu.dot_dimension_numbers<[1], [1], [0], [0], [0, 0, 1, 0], [], []>} : vector<2x128xf32>, vector<2x128xf32>, vector<2x2xf32> -> vector<2x2xf32>
      %54 = math.exp %53 : vector<2x2xf32>
      %cst_32 = arith.constant dense<0.000000e+00> : vector<2x2xf32>
      %55 = tpu.matmul %40, %52, %cst_32 {dimension_numbers = #tpu.dot_dimension_numbers<[1], [1], [0], [0], [0, 0, 1, 0], [], []>} : vector<2x128xf32>, vector<2x128xf32>, vector<2x2xf32> -> vector<2x2xf32>
      %56 = math.exp %55 : vector<2x2xf32>
      %cst_33 = arith.constant dense<0.000000e+00> : vector<2x2xf32>
      %57 = tpu.matmul %52, %40, %cst_33 {dimension_numbers = #tpu.dot_dimension_numbers<[1], [1], [0], [0], [0, 0, 1, 0], [], []>} : vector<2x128xf32>, vector<2x128xf32>, vector<2x2xf32> -> vector<2x2xf32>
      %58 = math.exp %57 : vector<2x2xf32>
      %cst_34 = arith.constant dense<0.000000e+00> : vector<2x2xf32>
      %59 = tpu.matmul %52, %52, %cst_34 {dimension_numbers = #tpu.dot_dimension_numbers<[1], [1], [0], [0], [0, 0, 1, 0], [], []>} : vector<2x128xf32>, vector<2x128xf32>, vector<2x2xf32> -> vector<2x2xf32>
      %60 = math.exp %59 : vector<2x2xf32>
      %cst_35 = arith.constant dense<0.000000e+00> : vector<2xf32>
      %61 = vector.multi_reduction <add>, %54, %cst_35 [1] : vector<2x2xf32> to vector<2xf32>
      %62 = vector.shape_cast %61 : vector<2xf32> to vector<2x1xf32>
      %cst_36 = arith.constant dense<0.000000e+00> : vector<2xf32>
      %63 = vector.multi_reduction <add>, %56, %cst_36 [1] : vector<2x2xf32> to vector<2xf32>
      %64 = vector.shape_cast %63 : vector<2xf32> to vector<2x1xf32>
      %65 = arith.addf %62, %64 : vector<2x1xf32>
      %cst_37 = arith.constant 7.3890562 : f32
      %66 = vector.broadcast %cst_37 : f32 to vector<2x1xf32>
      %67 = arith.subf %65, %66 : vector<2x1xf32>
      %cst_38 = arith.constant dense<0.000000e+00> : vector<2xf32>
      %68 = vector.multi_reduction <add>, %60, %cst_38 [1] : vector<2x2xf32> to vector<2xf32>
      %69 = vector.shape_cast %68 : vector<2xf32> to vector<2x1xf32>
      %cst_39 = arith.constant dense<0.000000e+00> : vector<2xf32>
      %70 = vector.multi_reduction <add>, %58, %cst_39 [1] : vector<2x2xf32> to vector<2xf32>
      %71 = vector.shape_cast %70 : vector<2xf32> to vector<2x1xf32>
      %72 = arith.addf %69, %71 : vector<2x1xf32>
      %cst_40 = arith.constant 7.3890562 : f32
      %73 = vector.broadcast %cst_40 : f32 to vector<2x1xf32>
      %74 = arith.subf %72, %73 : vector<2x1xf32>
      %75 = arith.mulf %40, %52 : vector<2x128xf32>
      %cst_41 = arith.constant dense<0.000000e+00> : vector<2xf32>
      %76 = vector.multi_reduction <add>, %75, %cst_41 [1] : vector<2x128xf32> to vector<2xf32>
      %77 = vector.shape_cast %76 : vector<2xf32> to vector<2x1xf32>
      %78 = math.exp %77 : vector<2x1xf32>
      %79 = arith.divf %78, %67 : vector<2x1xf32>
      %cst_42 = arith.constant 9.99999993E-9 : f32
      %80 = vector.broadcast %cst_42 : f32 to vector<2x1xf32>
      %81 = arith.addf %79, %80 : vector<2x1xf32>
      %82 = math.log %81 : vector<2x1xf32>
      %cst_43 = arith.constant 0.000000e+00 : f32
      %83 = vector.broadcast %cst_43 : f32 to vector<2x1xf32>
      %84 = arith.subf %83, %82 : vector<2x1xf32>
      %85 = arith.divf %78, %74 : vector<2x1xf32>
      %cst_44 = arith.constant 9.99999993E-9 : f32
      %86 = vector.broadcast %cst_44 : f32 to vector<2x1xf32>
      %87 = arith.addf %85, %86 : vector<2x1xf32>
      %88 = math.log %87 : vector<2x1xf32>
      %89 = arith.subf %84, %88 : vector<2x1xf32>
      %cst_45 = arith.constant dense<0.000000e+00> : vector<1xf32>
      %90 = vector.multi_reduction <add>, %89, %cst_45 [0] : vector<2x1xf32> to vector<1xf32>
      %91 = vector.shape_cast %90 : vector<1xf32> to vector<1x1xf32>
      %cst_46 = arith.constant 4.000000e+00 : f32
      %92 = vector.broadcast %cst_46 : f32 to vector<1x1xf32>
      %93 = arith.divf %91, %92 : vector<1x1xf32>
      %c32_i32_47 = arith.constant 32 : i32
      %94 = vector.broadcast %c32_i32_47 : i32 to vector<2x128xi32>
      %95 = arith.cmpi sge, %26, %94 : vector<2x128xi32>
      %c36_i32 = arith.constant 36 : i32
      %96 = vector.broadcast %c36_i32 : i32 to vector<2x128xi32>
      %97 = arith.cmpi slt, %26, %96 : vector<2x128xi32>
      %98 = arith.andi %95, %97 : vector<2x128xi1>
      %c0_48 = arith.constant 0 : index
      %c0_49 = arith.constant 0 : index
      %99 = vector.load %arg5[%c0_48, %c0_49] : memref<2x1xi32, #tpu.memory_space<vmem>>, vector<2x1xi32>
      %c32_i32_50 = arith.constant 32 : i32
      %100 = vector.broadcast %c32_i32_50 : i32 to vector<2x1xi32>
      %101 = arith.addi %99, %100 : vector<2x1xi32>
      %102 = vector.broadcast %101 : vector<2x1xi32> to vector<2x128xi32>
      %103 = arith.cmpi eq, %26, %102 : vector<2x128xi32>
      %104 = arith.extui %103 : vector<2x128xi1> to vector<2x128xi32>
      %105 = arith.sitofp %104 : vector<2x128xi32> to vector<2x128xf32>
      %cst_51 = arith.constant -1.000000e+30 : f32
      %106 = vector.broadcast %cst_51 : f32 to vector<2x128xf32>
      %107 = arith.select %98, %22, %106 : vector<2x128xi1>, vector<2x128xf32>
      %cst_52 = arith.constant dense<0xFF800000> : vector<2xf32>
      %108 = vector.multi_reduction <maximumf>, %107, %cst_52 [1] : vector<2x128xf32> to vector<2xf32>
      %109 = vector.shape_cast %108 : vector<2xf32> to vector<2x1xf32>
      %110 = vector.broadcast %109 : vector<2x1xf32> to vector<2x128xf32>
      %111 = arith.subf %107, %110 : vector<2x128xf32>
      %112 = math.exp %111 : vector<2x128xf32>
      %cst_53 = arith.constant dense<0.000000e+00> : vector<2xf32>
      %113 = vector.multi_reduction <add>, %112, %cst_53 [1] : vector<2x128xf32> to vector<2xf32>
      %114 = vector.shape_cast %113 : vector<2xf32> to vector<2x1xf32>
      %115 = math.log %114 : vector<2x1xf32>
      %116 = arith.addf %115, %109 : vector<2x1xf32>
      %117 = arith.mulf %105, %22 : vector<2x128xf32>
      %cst_54 = arith.constant dense<0.000000e+00> : vector<2xf32>
      %118 = vector.multi_reduction <add>, %117, %cst_54 [1] : vector<2x128xf32> to vector<2xf32>
      %119 = vector.shape_cast %118 : vector<2xf32> to vector<2x1xf32>
      %120 = arith.subf %116, %119 : vector<2x1xf32>
      %cst_55 = arith.constant dense<0.000000e+00> : vector<1xf32>
      %121 = vector.multi_reduction <add>, %120, %cst_55 [0] : vector<2x1xf32> to vector<1xf32>
      %122 = vector.shape_cast %121 : vector<1xf32> to vector<1x1xf32>
      %cst_56 = arith.constant 2.000000e+00 : f32
      %123 = vector.broadcast %cst_56 : f32 to vector<1x1xf32>
      %124 = arith.divf %122, %123 : vector<1x1xf32>
      %cst_57 = arith.constant -1.000000e+30 : f32
      %125 = vector.broadcast %cst_57 : f32 to vector<2x128xf32>
      %126 = arith.select %98, %25, %125 : vector<2x128xi1>, vector<2x128xf32>
      %cst_58 = arith.constant dense<0xFF800000> : vector<2xf32>
      %127 = vector.multi_reduction <maximumf>, %126, %cst_58 [1] : vector<2x128xf32> to vector<2xf32>
      %128 = vector.shape_cast %127 : vector<2xf32> to vector<2x1xf32>
      %129 = vector.broadcast %128 : vector<2x1xf32> to vector<2x128xf32>
      %130 = arith.subf %126, %129 : vector<2x128xf32>
      %131 = math.exp %130 : vector<2x128xf32>
      %cst_59 = arith.constant dense<0.000000e+00> : vector<2xf32>
      %132 = vector.multi_reduction <add>, %131, %cst_59 [1] : vector<2x128xf32> to vector<2xf32>
      %133 = vector.shape_cast %132 : vector<2xf32> to vector<2x1xf32>
      %134 = math.log %133 : vector<2x1xf32>
      %135 = arith.addf %134, %128 : vector<2x1xf32>
      %136 = arith.mulf %105, %25 : vector<2x128xf32>
      %cst_60 = arith.constant dense<0.000000e+00> : vector<2xf32>
      %137 = vector.multi_reduction <add>, %136, %cst_60 [1] : vector<2x128xf32> to vector<2xf32>
      %138 = vector.shape_cast %137 : vector<2xf32> to vector<2x1xf32>
      %139 = arith.subf %135, %138 : vector<2x1xf32>
      %cst_61 = arith.constant dense<0.000000e+00> : vector<1xf32>
      %140 = vector.multi_reduction <add>, %139, %cst_61 [0] : vector<2x1xf32> to vector<1xf32>
      %141 = vector.shape_cast %140 : vector<1xf32> to vector<1x1xf32>
      %cst_62 = arith.constant 2.000000e+00 : f32
      %142 = vector.broadcast %cst_62 : f32 to vector<1x1xf32>
      %143 = arith.divf %141, %142 : vector<1x1xf32>
      %144 = arith.addf %124, %143 : vector<1x1xf32>
      %cst_63 = arith.constant 2.000000e-01 : f32
      %145 = vector.broadcast %cst_63 : f32 to vector<1x1xf32>
      %146 = arith.mulf %145, %144 : vector<1x1xf32>
      %147 = arith.addf %93, %146 : vector<1x1xf32>
      %c0_64 = arith.constant 0 : index
      %c0_65 = arith.constant 0 : index
      %148 = vector.load %arg6[%c0_64, %c0_65] : memref<1x1xf32, #tpu.memory_space<vmem>>, vector<1x1xf32>
      tpu.vector_store %arg6[%c0_64, %c0_65], %147 {strides = array<i32>} : memref<1x1xf32, #tpu.memory_space<vmem>>, vector<1x1xf32>,
    } else {
    }
    return
  }
  func.func @transform_0(%arg0: i32) -> (i32, i32) {
    %c0_i32 = arith.constant 0 : i32
    %c0_i32_0 = arith.constant 0 : i32
    return %c0_i32, %arg0 : i32, i32
  }
  func.func @transform_1(%arg0: i32) -> (i32, i32) {
    %c0_i32 = arith.constant 0 : i32
    %c0_i32_0 = arith.constant 0 : i32
    return %c0_i32, %arg0 : i32, i32
  }
  func.func @transform_2(%arg0: i32) -> (i32, i32) {
    %c0_i32 = arith.constant 0 : i32
    %c0_i32_0 = arith.constant 0 : i32
    return %arg0, %c0_i32 : i32, i32
  }
  func.func @transform_3(%arg0: i32) -> (i32, i32) {
    %c0_i32 = arith.constant 0 : i32
    %c0_i32_0 = arith.constant 0 : i32
    %c0_i32_1 = arith.constant 0 : i32
    return %c0_i32, %c0_i32_0 : i32, i32
  }
  func.func @transform_4(%arg0: i32) -> (i32, i32) {
    %c0_i32 = arith.constant 0 : i32
    %c0_i32_0 = arith.constant 0 : i32
    %c0_i32_1 = arith.constant 0 : i32
    return %c0_i32, %c0_i32_0 : i32, i32
  }
  func.func @transform_5(%arg0: i32) -> (i32, i32) {
    %c0_i32 = arith.constant 0 : i32
    %c0_i32_0 = arith.constant 0 : i32
    %c0_i32_1 = arith.constant 0 : i32
    return %c0_i32, %c0_i32_0 : i32, i32
  }
}

</mosaic_0001>

<llo_original>
// kernel: tpu_custom_call.1
$region0: #{tpu_custom_call.1}
  #allocation0 [shape = 'u32[]', space=smem, size = 0x4, offset = 0x4, fixed_abs, tag = 'smem constant byte address 0x4 - core index']
  #allocation1 [shape = 'u32[144,128]{1,0:T(1,128)}', space=vmem, size = 0x12000, scoped, tag = 'internal scratch']
  #allocation2 [shape = 'f32[2,128]{1,0:T(2,128)}', space=vmem, size = 0x400, scoped, tag = 'scratch operand']
  #allocation3 [shape = 'f32[2,128]{1,0:T(2,128)}', space=vmem, size = 0x400, scoped, tag = 'scratch operand']
  %s0 = inlined_call_operand.hbm [shape: f32[2,1024], index: 0, kind: input, shape index: {}]
  %s1 = inlined_call_operand.hbm [shape: f32[2,1024], index: 1, kind: input, shape index: {}]
  %s2 = inlined_call_operand.hbm [shape: bf16[1024,128], index: 2, kind: input, shape index: {}]
  %s3 = inlined_call_operand.vmem [shape: f32[1,128], index: 3, kind: input, shape index: {}]
  %s4 = inlined_call_operand.vmem [shape: s32[2,1], index: 4, kind: input, shape index: {}]
  %s5 = inlined_call_operand.hbm [shape: f32[1,1], index: 5, kind: output, shape index: {}]
  %s6 = sld [smem:[#allocation0]]
  $region50: #{tpu_custom_call.1} parent=0
    _
  %s8 = ssub.s32 1, %s6
  %s9 = scalar_select 0, %s8, %s6
  $region1: #{tpu_custom_call.1} parent=0
    #allocation4 [shape = 'u8[8192]{0}', space=vmem, size = 0x2000, scoped, tag = 'input window, operand 0, single buffered']
    #allocation5 [shape = 's32[1]{0}', space=sflag, size = 0x4, scoped, tag = 'scoped memory for tpu_custom_call.1']
    #allocation6 [shape = 's32[1]{0}', space=sflag, size = 0x4, scoped, tag = 'scoped memory for tpu_custom_call.1']
    #allocation7 [shape = 'u8[8192]{0}', space=vmem, size = 0x2000, scoped, tag = 'input window, operand 1, single buffered']
    #allocation8 [shape = 's32[1]{0}', space=sflag, size = 0x4, scoped, tag = 'scoped memory for tpu_custom_call.1']
    #allocation9 [shape = 'u8[262144]{0}', space=vmem, size = 0x40000, scoped, tag = 'input window, operand 2, single buffered']
    #allocation10 [shape = 'u8[512]{0}', space=vmem, size = 0x400, scoped, tag = 'output window, operand 0, single buffered']
    %10 = vsyncpa [#allocation5], 0
    %11 = vsyncpa [#allocation8], 0
    %12 = vsyncpa [#allocation6], 0
    // Predicated region
    $region2: #{tpu_custom_call.1} parent=1 // pred_check
      _
    $region3: #{tpu_custom_call.1} parent=1 // pred_check_branch
      %14 = sbr.rel (0) target = $region5
    $region4: #{tpu_custom_call.1} parent=1 // pred_region
      %s16 = ssub.s32 256, 256
      %17 = vsyncadd [#allocation5], %s16
      %s19 = sshll.u32 [#allocation4], 4
      %s20 = int_to_ptr.vmem [resolvable:$true] %s19
      %22 = dma.hbm_to_vmem [thread:$0]  %s0, 256, %s20, [#allocation5]
    $region5: #{tpu_custom_call.1} parent=1 // pred_fallthru
      _
    // Predicated region
    $region6: #{tpu_custom_call.1} parent=1 // pred_check
      _
    $region7: #{tpu_custom_call.1} parent=1 // pred_check_branch
      %24 = sbr.rel (0) target = $region9
    $region8: #{tpu_custom_call.1} parent=1 // pred_region
      %s26 = ssub.s32 256, 256
      %27 = vsyncadd [#allocation8], %s26
      %s29 = sshll.u32 [#allocation7], 4
      %s30 = int_to_ptr.vmem [resolvable:$true] %s29
      %32 = dma.hbm_to_vmem [thread:$0]  %s1, 256, %s30, [#allocation8]
    $region9: #{tpu_custom_call.1} parent=1 // pred_fallthru
      _
    // Predicated region
    $region10: #{tpu_custom_call.1} parent=1 // pred_check
      _
    $region11: #{tpu_custom_call.1} parent=1 // pred_check_branch
      %34 = sbr.rel (0) target = $region13
    $region12: #{tpu_custom_call.1} parent=1 // pred_region
      %s36 = ssub.s32 8192, 8192
      %37 = vsyncadd [#allocation8], %s36
      %s38 = sshll.u32 [#allocation9], 4
      %s39 = int_to_ptr.vmem [resolvable:$true] %s38
      %44 = dma.hbm_to_vmem [thread:$0]  %s2, 8192, %s39, [#allocation8], 64, 64, 4
    $region13: #{tpu_custom_call.1} parent=1 // pred_fallthru
      _
    // Predicated region
    $region14: #{tpu_custom_call.1} parent=1 // pred_check
      _
    $region15: #{tpu_custom_call.1} parent=1 // pred_check_branch
      %46 = sbr.rel (0) target = $region17
    $region16: #{tpu_custom_call.1} parent=1 // pred_region
      _
    $region17: #{tpu_custom_call.1} parent=1 // pred_fallthru
      _
    // Predicated region
    $region18: #{tpu_custom_call.1} parent=1 // pred_check
      _
    $region19: #{tpu_custom_call.1} parent=1 // pred_check_branch
      %48 = sbr.rel (0) target = $region21
    $region20: #{tpu_custom_call.1} parent=1 // pred_region
      _
    $region21: #{tpu_custom_call.1} parent=1 // pred_fallthru
      _
    // Predicated region
    $region22: #{tpu_custom_call.1} parent=1 // pred_check
      _
    $region23: #{tpu_custom_call.1} parent=1 // pred_check_branch
      %50 = sbr.rel (0) target = $region25
    $region24: #{tpu_custom_call.1} parent=1 // pred_region
      %51 = dma.done [#allocation5], 256
    $region25: #{tpu_custom_call.1} parent=1 // pred_fallthru
      _
    // Predicated region
    $region26: #{tpu_custom_call.1} parent=1 // pred_check
      _
    $region27: #{tpu_custom_call.1} parent=1 // pred_check_branch
      %53 = sbr.rel (0) target = $region29
    $region28: #{tpu_custom_call.1} parent=1 // pred_region
      %54 = dma.done [#allocation8], 256
    $region29: #{tpu_custom_call.1} parent=1 // pred_fallthru
      _
    // Predicated region
    $region30: #{tpu_custom_call.1} parent=1 // pred_check
      _
    $region31: #{tpu_custom_call.1} parent=1 // pred_check_branch
      %56 = sbr.rel (0) target = $region33
    $region32: #{tpu_custom_call.1} parent=1 // pred_region
      %57 = dma.done [#allocation8], 8192
    $region33: #{tpu_custom_call.1} parent=1 // pred_fallthru
      _
    %p59 = scmp.eq.s32.totalorder 0, 0
    // Predicated region
    $region34: #{tpu_custom_call.1} parent=1 // pred_check
      %p60 = pneg %p59
    $region35: #{tpu_custom_call.1} parent=1 // pred_check_branch
      %62 = sbr.rel (%p60) target = $region37
    $region36: #{tpu_custom_call.1} parent=1 // pred_region
      %63 = vst [vmem:[#allocation2] sm:$0x3] 0.0
      %64 = vst [vmem:[#allocation3] sm:$0x3] 0.0
    $region37: #{tpu_custom_call.1} parent=1 // pred_fallthru
      _
    %v65 = vld [vmem:[#allocation9] sm:$0xf]
    %v66 = vld [vmem:[#allocation9 + $0x4] sm:$0xf]
    %v67 = vld [vmem:[#allocation9 + $0x8] sm:$0xf]
    %v68 = vld [vmem:[#allocation9 + $0xc] sm:$0xf]
    %v69 = vld [vmem:[#allocation9 + $0x10] sm:$0xf]
    %v70 = vld [vmem:[#allocation9 + $0x14] sm:$0xf]
    %v71 = vld [vmem:[#allocation9 + $0x18] sm:$0xf]
    %v72 = vld [vmem:[#allocation9 + $0x1c] sm:$0xf]
    %v73 = vld [vmem:[#allocation9 + $0x20] sm:$0xf]
    %v74 = vld [vmem:[#allocation9 + $0x24] sm:$0xf]
    %v75 = vld [vmem:[#allocation9 + $0x28] sm:$0xf]
    %v76 = vld [vmem:[#allocation9 + $0x2c] sm:$0xf]
    %v77 = vld [vmem:[#allocation9 + $0x30] sm:$0xf]
    %v78 = vld [vmem:[#allocation9 + $0x34] sm:$0xf]
    %v79 = vld [vmem:[#allocation9 + $0x38] sm:$0xf]
    %v80 = vld [vmem:[#allocation9 + $0x3c] sm:$0xf]
    %v81 = vld [vmem:[#allocation9 + $0x40] sm:$0xf]
    %v82 = vld [vmem:[#allocation9 + $0x44] sm:$0xf]
    %v83 = vld [vmem:[#allocation9 + $0x48] sm:$0xf]
    %v84 = vld [vmem:[#allocation9 + $0x4c] sm:$0xf]
    %v85 = vld [vmem:[#allocation9 + $0x50] sm:$0xf]
    %v86 = vld [vmem:[#allocation9 + $0x54] sm:$0xf]
    %v87 = vld [vmem:[#allocation9 + $0x58] sm:$0xf]
    %v88 = vld [vmem:[#allocation9 + $0x5c] sm:$0xf]
    %v89 = vld [vmem:[#allocation9 + $0x60] sm:$0xf]
    %v90 = vld [vmem:[#allocation9 + $0x64] sm:$0xf]
    %v91 = vld [vmem:[#allocation9 + $0x68] sm:$0xf]
    %v92 = vld [vmem:[#allocation9 + $0x6c] sm:$0xf]
    %v93 = vld [vmem:[#allocation9 + $0x70] sm:$0xf]
    %v94 = vld [vmem:[#allocation9 + $0x74] sm:$0xf]
    %v95 = vld [vmem:[#allocation9 + $0x78] sm:$0xf]
    %v96 = vld [vmem:[#allocation9 + $0x7c] sm:$0xf]
    %v97 = vld [vmem:[#allocation9 + $0x80] sm:$0xf]
    %v98 = vld [vmem:[#allocation9 + $0x84] sm:$0xf]
    %v99 = vld [vmem:[#allocation9 + $0x88] sm:$0xf]
    %v100 = vld [vmem:[#allocation9 + $0x8c] sm:$0xf]
    %v101 = vld [vmem:[#allocation9 + $0x90] sm:$0xf]
    %v102 = vld [vmem:[#allocation9 + $0x94] sm:$0xf]
    %v103 = vld [vmem:[#allocation9 + $0x98] sm:$0xf]
    %v104 = vld [vmem:[#allocation9 + $0x9c] sm:$0xf]
    %v105 = vld [vmem:[#allocation9 + $0xa0] sm:$0xf]
    %v106 = vld [vmem:[#allocation9 + $0xa4] sm:$0xf]
    %v107 = vld [vmem:[#allocation9 + $0xa8] sm:$0xf]
    %v108 = vld [vmem:[#allocation9 + $0xac] sm:$0xf]
    %v109 = vld [vmem:[#allocation9 + $0xb0] sm:$0xf]
    %v110 = vld [vmem:[#allocation9 + $0xb4] sm:$0xf]
    %v111 = vld [vmem:[#allocation9 + $0xb8] sm:$0xf]
    %v112 = vld [vmem:[#allocation9 + $0xbc] sm:$0xf]
    %v113 = vld [vmem:[#allocation9 + $0xc0] sm:$0xf]
    %v114 = vld [vmem:[#allocation9 + $0xc4] sm:$0xf]
    %v115 = vld [vmem:[#allocation9 + $0xc8] sm:$0xf]
    %v116 = vld [vmem:[#allocation9 + $0xcc] sm:$0xf]
    %v117 = vld [vmem:[#allocation9 + $0xd0] sm:$0xf]
    %v118 = vld [vmem:[#allocation9 + $0xd4] sm:$0xf]
    %v119 = vld [vmem:[#allocation9 + $0xd8] sm:$0xf]
    %v120 = vld [vmem:[#allocation9 + $0xdc] sm:$0xf]
    %v121 = vld [vmem:[#allocation9 + $0xe0] sm:$0xf]
    %v122 = vld [vmem:[#allocation9 + $0xe4] sm:$0xf]
    %v123 = vld [vmem:[#allocation9 + $0xe8] sm:$0xf]
    %v124 = vld [vmem:[#allocation9 + $0xec] sm:$0xf]
    %v125 = vld [vmem:[#allocation9 + $0xf0] sm:$0xf]
    %v126 = vld [vmem:[#allocation9 + $0xf4] sm:$0xf]
    %v127 = vld [vmem:[#allocation9 + $0xf8] sm:$0xf]
    %v128 = vld [vmem:[#allocation9 + $0xfc] sm:$0xf]
    %v129 = vld [vmem:[#allocation9 + $0x100] sm:$0xf]
    %v130 = vld [vmem:[#allocation9 + $0x104] sm:$0xf]
    %v131 = vld [vmem:[#allocation9 + $0x108] sm:$0xf]
    %v132 = vld [vmem:[#allocation9 + $0x10c] sm:$0xf]
    %v133 = vld [vmem:[#allocation9 + $0x110] sm:$0xf]
    %v134 = vld [vmem:[#allocation9 + $0x114] sm:$0xf]
    %v135 = vld [vmem:[#allocation9 + $0x118] sm:$0xf]
    %v136 = vld [vmem:[#allocation9 + $0x11c] sm:$0xf]
    %v137 = vld [vmem:[#allocation9 + $0x120] sm:$0xf]
    %v138 = vld [vmem:[#allocation9 + $0x124] sm:$0xf]
    %v139 = vld [vmem:[#allocation9 + $0x128] sm:$0xf]
    %v140 = vld [vmem:[#allocation9 + $0x12c] sm:$0xf]
    %v141 = vld [vmem:[#allocation9 + $0x130] sm:$0xf]
    %v142 = vld [vmem:[#allocation9 + $0x134] sm:$0xf]
    %v143 = vld [vmem:[#allocation9 + $0x138] sm:$0xf]
    %v144 = vld [vmem:[#allocation9 + $0x13c] sm:$0xf]
    %v145 = vld [vmem:[#allocation9 + $0x140] sm:$0xf]
    %v146 = vld [vmem:[#allocation9 + $0x144] sm:$0xf]
    %v147 = vld [vmem:[#allocation9 + $0x148] sm:$0xf]
    %v148 = vld [vmem:[#allocation9 + $0x14c] sm:$0xf]
    %v149 = vld [vmem:[#allocation9 + $0x150] sm:$0xf]
    %v150 = vld [vmem:[#allocation9 + $0x154] sm:$0xf]
    %v151 = vld [vmem:[#allocation9 + $0x158] sm:$0xf]
    %v152 = vld [vmem:[#allocation9 + $0x15c] sm:$0xf]
    %v153 = vld [vmem:[#allocation9 + $0x160] sm:$0xf]
    %v154 = vld [vmem:[#allocation9 + $0x164] sm:$0xf]
    %v155 = vld [vmem:[#allocation9 + $0x168] sm:$0xf]
    %v156 = vld [vmem:[#allocation9 + $0x16c] sm:$0xf]
    %v157 = vld [vmem:[#allocation9 + $0x170] sm:$0xf]
    %v158 = vld [vmem:[#allocation9 + $0x174] sm:$0xf]
    %v159 = vld [vmem:[#allocation9 + $0x178] sm:$0xf]
    %v160 = vld [vmem:[#allocation9 + $0x17c] sm:$0xf]
    %v161 = vld [vmem:[#allocation9 + $0x180] sm:$0xf]
    %v162 = vld [vmem:[#allocation9 + $0x184] sm:$0xf]
    %v163 = vld [vmem:[#allocation9 + $0x188] sm:$0xf]
    %v164 = vld [vmem:[#allocation9 + $0x18c] sm:$0xf]
    %v165 = vld [vmem:[#allocation9 + $0x190] sm:$0xf]
    %v166 = vld [vmem:[#allocation9 + $0x194] sm:$0xf]
    %v167 = vld [vmem:[#allocation9 + $0x198] sm:$0xf]
    %v168 = vld [vmem:[#allocation9 + $0x19c] sm:$0xf]
    %v169 = vld [vmem:[#allocation9 + $0x1a0] sm:$0xf]
    %v170 = vld [vmem:[#allocation9 + $0x1a4] sm:$0xf]
    %v171 = vld [vmem:[#allocation9 + $0x1a8] sm:$0xf]
    %v172 = vld [vmem:[#allocation9 + $0x1ac] sm:$0xf]
    %v173 = vld [vmem:[#allocation9 + $0x1b0] sm:$0xf]
    %v174 = vld [vmem:[#allocation9 + $0x1b4] sm:$0xf]
    %v175 = vld [vmem:[#allocation9 + $0x1b8] sm:$0xf]
    %v176 = vld [vmem:[#allocation9 + $0x1bc] sm:$0xf]
    %v177 = vld [vmem:[#allocation9 + $0x1c0] sm:$0xf]
    %v178 = vld [vmem:[#allocation9 + $0x1c4] sm:$0xf]
    %v179 = vld [vmem:[#allocation9 + $0x1c8] sm:$0xf]
    %v180 = vld [vmem:[#allocation9 + $0x1cc] sm:$0xf]
    %v181 = vld [vmem:[#allocation9 + $0x1d0] sm:$0xf]
    %v182 = vld [vmem:[#allocation9 + $0x1d4] sm:$0xf]
    %v183 = vld [vmem:[#allocation9 + $0x1d8] sm:$0xf]
    %v184 = vld [vmem:[#allocation9 + $0x1dc] sm:$0xf]
    %v185 = vld [vmem:[#allocation9 + $0x1e0] sm:$0xf]
    %v186 = vld [vmem:[#allocation9 + $0x1e4] sm:$0xf]
    %v187 = vld [vmem:[#allocation9 + $0x1e8] sm:$0xf]
    %v188 = vld [vmem:[#allocation9 + $0x1ec] sm:$0xf]
    %v189 = vld [vmem:[#allocation9 + $0x1f0] sm:$0xf]
    %v190 = vld [vmem:[#allocation9 + $0x1f4] sm:$0xf]
    %v191 = vld [vmem:[#allocation9 + $0x1f8] sm:$0xf]
    %v192 = vld [vmem:[#allocation9 + $0x1fc] sm:$0xf]
    %v193 = vld [vmem:[#allocation2] sm:$0x3]
    %v194 = vld [vmem:[#allocation4] sm:$0xff]
    %v195 = vld [vmem:[#allocation4 + $0x8] sm:$0xff]
    %v198 = vcombine.high %v194, %v194
    %v200 = vunpack.c.l.s4 1983009808
    %v201 = vunpack.c.0.s8 %v200
    %v202 = vlaneseq
    %v203 = vshrl.u32 %v202, 7
    %v204 = vsub.s32 %v201, %v203
    %v205 = vrot.slane %v194, %v204
    %v207 = vunpack.c.l.s4 1983009808
    %v208 = vunpack.c.0.s8 %v207
    %v209 = vlaneseq
    %v210 = vshrl.u32 %v209, 7
    %v211 = vsub.s32 %v208, %v210
    %v212 = vrot.slane %v198, %v211
    %v213 = vcombine.high %v205, %v205
    %v214 = vcombine.high %v212, %v212
    %v215 = vcombine.high %v195, %v195
    %v217 = vunpack.c.l.s4 1983009808
    %v218 = vunpack.c.0.s8 %v217
    %v219 = vlaneseq
    %v220 = vshrl.u32 %v219, 7
    %v221 = vsub.s32 %v218, %v220
    %v222 = vrot.slane %v195, %v221
    %v224 = vunpack.c.l.s4 1983009808
    %v225 = vunpack.c.0.s8 %v224
    %v226 = vlaneseq
    %v227 = vshrl.u32 %v226, 7
    %v228 = vsub.s32 %v225, %v227
    %v229 = vrot.slane %v215, %v228
    %v230 = vcombine.high %v222, %v222
    %v231 = vcombine.high %v229, %v229
    %v240 = vpack.c.bf16 %v205, %v205
    %v241 = vpack.c.bf16 %v213, %v213
    %v242 = vpack.c.bf16 %v212, %v212
    %v243 = vpack.c.bf16 %v214, %v214
    %v244 = vpack.c.bf16 %v222, %v222
    %v245 = vpack.c.bf16 %v230, %v230
    %v246 = vpack.c.bf16 %v229, %v229
    %v247 = vpack.c.bf16 %v231, %v231
    %v376 = vunpack.c.l.b16 %v65
    %v377 = vunpack.c.l.b16 %v66
    %v378 = vunpack.c.l.b16 %v67
    %v379 = vunpack.c.l.b16 %v68
    %v380 = vunpack.c.l.b16 %v69
    %v381 = vunpack.c.l.b16 %v70
    %v382 = vunpack.c.l.b16 %v71
    %v383 = vunpack.c.l.b16 %v72
    %v384 = vunpack.c.l.b16 %v73
    %v385 = vunpack.c.l.b16 %v74
    %v386 = vunpack.c.l.b16 %v75
    %v387 = vunpack.c.l.b16 %v76
    %v388 = vunpack.c.l.b16 %v77
    %v389 = vunpack.c.l.b16 %v78
    %v390 = vunpack.c.l.b16 %v79
    %v391 = vunpack.c.l.b16 %v80
    %v392 = vunpack.c.l.b16 %v81
    %v393 = vunpack.c.l.b16 %v82
    %v394 = vunpack.c.l.b16 %v83
    %v395 = vunpack.c.l.b16 %v84
    %v396 = vunpack.c.l.b16 %v85
    %v397 = vunpack.c.l.b16 %v86
    %v398 = vunpack.c.l.b16 %v87
    %v399 = vunpack.c.l.b16 %v88
    %v400 = vunpack.c.l.b16 %v89
    %v401 = vunpack.c.l.b16 %v90
    %v402 = vunpack.c.l.b16 %v91
    %v403 = vunpack.c.l.b16 %v92
    %v404 = vunpack.c.l.b16 %v93
    %v405 = vunpack.c.l.b16 %v94
    %v406 = vunpack.c.l.b16 %v95
    %v407 = vunpack.c.l.b16 %v96
    %v408 = vunpack.c.l.b16 %v97
    %v409 = vunpack.c.l.b16 %v98
    %v410 = vunpack.c.l.b16 %v99
    %v411 = vunpack.c.l.b16 %v100
    %v412 = vunpack.c.l.b16 %v101
    %v413 = vunpack.c.l.b16 %v102
    %v414 = vunpack.c.l.b16 %v103
    %v415 = vunpack.c.l.b16 %v104
    %v416 = vunpack.c.l.b16 %v105
    %v417 = vunpack.c.l.b16 %v106
    %v418 = vunpack.c.l.b16 %v107
    %v419 = vunpack.c.l.b16 %v108
    %v420 = vunpack.c.l.b16 %v109
    %v421 = vunpack.c.l.b16 %v110
    %v422 = vunpack.c.l.b16 %v111
    %v423 = vunpack.c.l.b16 %v112
    %v424 = vunpack.c.l.b16 %v113
    %v425 = vunpack.c.l.b16 %v114
    %v426 = vunpack.c.l.b16 %v115
    %v427 = vunpack.c.l.b16 %v116
    %v428 = vunpack.c.l.b16 %v117
    %v429 = vunpack.c.l.b16 %v118
    %v430 = vunpack.c.l.b16 %v119
    %v431 = vunpack.c.l.b16 %v120
    %v432 = vunpack.c.l.b16 %v121
    %v433 = vunpack.c.l.b16 %v122
    %v434 = vunpack.c.l.b16 %v123
    %v435 = vunpack.c.l.b16 %v124
    %v436 = vunpack.c.l.b16 %v125
    %v437 = vunpack.c.l.b16 %v126
    %v438 = vunpack.c.l.b16 %v127
    %v439 = vunpack.c.l.b16 %v128
    %v440 = vunpack.c.l.b16 %v129
    %v441 = vunpack.c.l.b16 %v130
    %v442 = vunpack.c.l.b16 %v131
    %v443 = vunpack.c.l.b16 %v132
    %v444 = vunpack.c.l.b16 %v133
    %v445 = vunpack.c.l.b16 %v134
    %v446 = vunpack.c.l.b16 %v135
    %v447 = vunpack.c.l.b16 %v136
    %v448 = vunpack.c.l.b16 %v137
    %v449 = vunpack.c.l.b16 %v138
    %v450 = vunpack.c.l.b16 %v139
    %v451 = vunpack.c.l.b16 %v140
    %v452 = vunpack.c.l.b16 %v141
    %v453 = vunpack.c.l.b16 %v142
    %v454 = vunpack.c.l.b16 %v143
    %v455 = vunpack.c.l.b16 %v144
    %v456 = vunpack.c.l.b16 %v145
    %v457 = vunpack.c.l.b16 %v146
    %v458 = vunpack.c.l.b16 %v147
    %v459 = vunpack.c.l.b16 %v148
    %v460 = vunpack.c.l.b16 %v149
    %v461 = vunpack.c.l.b16 %v150
    %v462 = vunpack.c.l.b16 %v151
    %v463 = vunpack.c.l.b16 %v152
    %v464 = vunpack.c.l.b16 %v153
    %v465 = vunpack.c.l.b16 %v154
    %v466 = vunpack.c.l.b16 %v155
    %v467 = vunpack.c.l.b16 %v156
    %v468 = vunpack.c.l.b16 %v157
    %v469 = vunpack.c.l.b16 %v158
    %v470 = vunpack.c.l.b16 %v159
    %v471 = vunpack.c.l.b16 %v160
    %v472 = vunpack.c.l.b16 %v161
    %v473 = vunpack.c.l.b16 %v162
    %v474 = vunpack.c.l.b16 %v163
    %v475 = vunpack.c.l.b16 %v164
    %v476 = vunpack.c.l.b16 %v165
    %v477 = vunpack.c.l.b16 %v166
    %v478 = vunpack.c.l.b16 %v167
    %v479 = vunpack.c.l.b16 %v168
    %v480 = vunpack.c.l.b16 %v169
    %v481 = vunpack.c.l.b16 %v170
    %v482 = vunpack.c.l.b16 %v171
    %v483 = vunpack.c.l.b16 %v172
    %v484 = vunpack.c.l.b16 %v173
    %v485 = vunpack.c.l.b16 %v174
    %v486 = vunpack.c.l.b16 %v175
    %v487 = vunpack.c.l.b16 %v176
    %v488 = vunpack.c.l.b16 %v177
    %v489 = vunpack.c.l.b16 %v178
    %v490 = vunpack.c.l.b16 %v179
    %v491 = vunpack.c.l.b16 %v180
    %v492 = vunpack.c.l.b16 %v181
    %v493 = vunpack.c.l.b16 %v182
    %v494 = vunpack.c.l.b16 %v183
    %v495 = vunpack.c.l.b16 %v184
    %v496 = vunpack.c.l.b16 %v185
    %v497 = vunpack.c.l.b16 %v186
    %v498 = vunpack.c.l.b16 %v187
    %v499 = vunpack.c.l.b16 %v188
    %v500 = vunpack.c.l.b16 %v189
    %v501 = vunpack.c.l.b16 %v190
    %v502 = vunpack.c.l.b16 %v191
    %v503 = vunpack.c.l.b16 %v192
    %v504 = vpack.c.b16 %v377, %v376
    %v505 = vpack.c.b16 %v379, %v378
    %v506 = vpack.c.b16 %v381, %v380
    %v507 = vpack.c.b16 %v383, %v382
    %v508 = vpack.c.b16 %v385, %v384
    %v509 = vpack.c.b16 %v387, %v386
    %v510 = vpack.c.b16 %v389, %v388
    %v511 = vpack.c.b16 %v391, %v390
    %v512 = vpack.c.b16 %v393, %v392
    %v513 = vpack.c.b16 %v395, %v394
    %v514 = vpack.c.b16 %v397, %v396
    %v515 = vpack.c.b16 %v399, %v398
    %v516 = vpack.c.b16 %v401, %v400
    %v517 = vpack.c.b16 %v403, %v402
    %v518 = vpack.c.b16 %v405, %v404
    %v519 = vpack.c.b16 %v407, %v406
    %v520 = vpack.c.b16 %v409, %v408
    %v521 = vpack.c.b16 %v411, %v410
    %v522 = vpack.c.b16 %v413, %v412
    %v523 = vpack.c.b16 %v415, %v414
    %v524 = vpack.c.b16 %v417, %v416
    %v525 = vpack.c.b16 %v419, %v418
    %v526 = vpack.c.b16 %v421, %v420
    %v527 = vpack.c.b16 %v423, %v422
    %v528 = vpack.c.b16 %v425, %v424
    %v529 = vpack.c.b16 %v427, %v426
    %v530 = vpack.c.b16 %v429, %v428
    %v531 = vpack.c.b16 %v431, %v430
    %v532 = vpack.c.b16 %v433, %v432
    %v533 = vpack.c.b16 %v435, %v434
    %v534 = vpack.c.b16 %v437, %v436
    %v535 = vpack.c.b16 %v439, %v438
    %v536 = vpack.c.b16 %v441, %v440
    %v537 = vpack.c.b16 %v443, %v442
    %v538 = vpack.c.b16 %v445, %v444
    %v539 = vpack.c.b16 %v447, %v446
    %v540 = vpack.c.b16 %v449, %v448
    %v541 = vpack.c.b16 %v451, %v450
    %v542 = vpack.c.b16 %v453, %v452
    %v543 = vpack.c.b16 %v455, %v454
    %v544 = vpack.c.b16 %v457, %v456
    %v545 = vpack.c.b16 %v459, %v458
    %v546 = vpack.c.b16 %v461, %v460
    %v547 = vpack.c.b16 %v463, %v462
    %v548 = vpack.c.b16 %v465, %v464
    %v549 = vpack.c.b16 %v467, %v466
    %v550 = vpack.c.b16 %v469, %v468
    %v551 = vpack.c.b16 %v471, %v470
    %v552 = vpack.c.b16 %v473, %v472
    %v553 = vpack.c.b16 %v475, %v474
    %v554 = vpack.c.b16 %v477, %v476
    %v555 = vpack.c.b16 %v479, %v478
    %v556 = vpack.c.b16 %v481, %v480
    %v557 = vpack.c.b16 %v483, %v482
    %v558 = vpack.c.b16 %v485, %v484
    %v559 = vpack.c.b16 %v487, %v486
    %v560 = vpack.c.b16 %v489, %v488
    %v561 = vpack.c.b16 %v491, %v490
    %v562 = vpack.c.b16 %v493, %v492
    %v563 = vpack.c.b16 %v495, %v494
    %v564 = vpack.c.b16 %v497, %v496
    %v565 = vpack.c.b16 %v499, %v498
    %v566 = vpack.c.b16 %v501, %v500
    %v567 = vpack.c.b16 %v503, %v502
    %632 = vmatprep.subr.bf16.mxu0 0
    %633 = vmatpush1.bf16.msra.mxu0 %v504
    %634 = vmatprep.subr.bf16.mxu0 0
    %635 = vmatpush1.bf16.msra.mxu0 %v505
    %636 = vmatprep.subr.bf16.mxu0 0
    %637 = vmatpush1.bf16.msra.mxu0 %v506
    %638 = vmatprep.subr.bf16.mxu0 0
    %639 = vmatpush1.bf16.msra.mxu0 %v507
    %640 = vmatprep.subr.bf16.mxu0 0
    %641 = vmatpush1.bf16.msra.mxu0 %v508
    %642 = vmatprep.subr.bf16.mxu0 0
    %643 = vmatpush1.bf16.msra.mxu0 %v509
    %644 = vmatprep.subr.bf16.mxu0 0
    %645 = vmatpush1.bf16.msra.mxu0 %v510
    %646 = vmatprep.subr.bf16.mxu0 0
    %647 = vmatpush1.bf16.msra.mxu0 %v511
    %648 = vmatprep.subr.bf16.mxu0 0
    %649 = vmatpush1.bf16.msra.mxu0 %v512
    %650 = vmatprep.subr.bf16.mxu0 0
    %651 = vmatpush1.bf16.msra.mxu0 %v513
    %652 = vmatprep.subr.bf16.mxu0 0
    %653 = vmatpush1.bf16.msra.mxu0 %v514
    %654 = vmatprep.subr.bf16.mxu0 0
    %655 = vmatpush1.bf16.msra.mxu0 %v515
    %656 = vmatprep.subr.bf16.mxu0 0
    %657 = vmatpush1.bf16.msra.mxu0 %v516
    %658 = vmatprep.subr.bf16.mxu0 0
    %659 = vmatpush1.bf16.msra.mxu0 %v517
    %660 = vmatprep.subr.bf16.mxu0 0
    %661 = vmatpush1.bf16.msra.mxu0 %v518
    %662 = vmatprep.subr.bf16.mxu0 0
    %663 = vmatpush1.bf16.msra.mxu0 %v519
    %664 = vmatprep.mubr.bf16.mxu0 %v241
    %665 = vmatmul.mubr.bf16.gmra.mrb[0].mxu0 %v240
    %v666 = vpop.f32.mrb[0].mxu0
    %v667 = vadd.f32 0.0, %v666
    %v668 = vpop.f32.mrb[0].mxu0
    %v669 = vpop.f32.mrb[0].mxu0
    %v670 = vpop.f32.mrb[0].mxu0
    %671 = vdwg.mxu0
    %672 = vmatprep.subr.bf16.mxu0 0
    %673 = vmatpush1.bf16.msra.mxu0 %v520
    %674 = vmatprep.subr.bf16.mxu0 0
    %675 = vmatpush1.bf16.msra.mxu0 %v521
    %676 = vmatprep.subr.bf16.mxu0 0
    %677 = vmatpush1.bf16.msra.mxu0 %v522
    %678 = vmatprep.subr.bf16.mxu0 0
    %679 = vmatpush1.bf16.msra.mxu0 %v523
    %680 = vmatprep.subr.bf16.mxu0 0
    %681 = vmatpush1.bf16.msra.mxu0 %v524
    %682 = vmatprep.subr.bf16.mxu0 0
    %683 = vmatpush1.bf16.msra.mxu0 %v525
    %684 = vmatprep.subr.bf16.mxu0 0
    %685 = vmatpush1.bf16.msra.mxu0 %v526
    %686 = vmatprep.subr.bf16.mxu0 0
    %687 = vmatpush1.bf16.msra.mxu0 %v527
    %688 = vmatprep.subr.bf16.mxu0 0
    %689 = vmatpush1.bf16.msra.mxu0 %v528
    %690 = vmatprep.subr.bf16.mxu0 0
    %691 = vmatpush1.bf16.msra.mxu0 %v529
    %692 = vmatprep.subr.bf16.mxu0 0
    %693 = vmatpush1.bf16.msra.mxu0 %v530
    %694 = vmatprep.subr.bf16.mxu0 0
    %695 = vmatpush1.bf16.msra.mxu0 %v531
    %696 = vmatprep.subr.bf16.mxu0 0
    %697 = vmatpush1.bf16.msra.mxu0 %v532
    %698 = vmatprep.subr.bf16.mxu0 0
    %699 = vmatpush1.bf16.msra.mxu0 %v533
    %700 = vmatprep.subr.bf16.mxu0 0
    %701 = vmatpush1.bf16.msra.mxu0 %v534
    %702 = vmatprep.subr.bf16.mxu0 0
    %703 = vmatpush1.bf16.msra.mxu0 %v535
    %704 = vmatprep.mubr.bf16.mxu0 %v243
    %705 = vmatmul.mubr.bf16.gmra.mrb[0].mxu0 %v242
    %v706 = vpop.f32.mrb[0].mxu0
    %v707 = vadd.f32 %v667, %v706
    %v708 = vpop.f32.mrb[0].mxu0
    %v709 = vpop.f32.mrb[0].mxu0
    %v710 = vpop.f32.mrb[0].mxu0
    %711 = vdwg.mxu0
    %712 = vmatprep.subr.bf16.mxu0 0
    %713 = vmatpush1.bf16.msra.mxu0 %v536
    %714 = vmatprep.subr.bf16.mxu0 0
    %715 = vmatpush1.bf16.msra.mxu0 %v537
    %716 = vmatprep.subr.bf16.mxu0 0
    %717 = vmatpush1.bf16.msra.mxu0 %v538
    %718 = vmatprep.subr.bf16.mxu0 0
    %719 = vmatpush1.bf16.msra.mxu0 %v539
    %720 = vmatprep.subr.bf16.mxu0 0
    %721 = vmatpush1.bf16.msra.mxu0 %v540
    %722 = vmatprep.subr.bf16.mxu0 0
    %723 = vmatpush1.bf16.msra.mxu0 %v541
    %724 = vmatprep.subr.bf16.mxu0 0
    %725 = vmatpush1.bf16.msra.mxu0 %v542
    %726 = vmatprep.subr.bf16.mxu0 0
    %727 = vmatpush1.bf16.msra.mxu0 %v543
    %728 = vmatprep.subr.bf16.mxu0 0
    %729 = vmatpush1.bf16.msra.mxu0 %v544
    %730 = vmatprep.subr.bf16.mxu0 0
    %731 = vmatpush1.bf16.msra.mxu0 %v545
    %732 = vmatprep.subr.bf16.mxu0 0
    %733 = vmatpush1.bf16.msra.mxu0 %v546
    %734 = vmatprep.subr.bf16.mxu0 0
    %735 = vmatpush1.bf16.msra.mxu0 %v547
    %736 = vmatprep.subr.bf16.mxu0 0
    %737 = vmatpush1.bf16.msra.mxu0 %v548
    %738 = vmatprep.subr.bf16.mxu0 0
    %739 = vmatpush1.bf16.msra.mxu0 %v549
    %740 = vmatprep.subr.bf16.mxu0 0
    %741 = vmatpush1.bf16.msra.mxu0 %v550
    %742 = vmatprep.subr.bf16.mxu0 0
    %743 = vmatpush1.bf16.msra.mxu0 %v551
    %744 = vmatprep.mubr.bf16.mxu0 %v245
    %745 = vmatmul.mubr.bf16.gmra.mrb[0].mxu0 %v244
    %v746 = vpop.f32.mrb[0].mxu0
    %v747 = vadd.f32 %v707, %v746
    %v748 = vpop.f32.mrb[0].mxu0
    %v749 = vpop.f32.mrb[0].mxu0
    %v750 = vpop.f32.mrb[0].mxu0
    %751 = vdwg.mxu0
    %752 = vmatprep.subr.bf16.mxu0 0
    %753 = vmatpush1.bf16.msra.mxu0 %v552
    %754 = vmatprep.subr.bf16.mxu0 0
    %755 = vmatpush1.bf16.msra.mxu0 %v553
    %756 = vmatprep.subr.bf16.mxu0 0
    %757 = vmatpush1.bf16.msra.mxu0 %v554
    %758 = vmatprep.subr.bf16.mxu0 0
    %759 = vmatpush1.bf16.msra.mxu0 %v555
    %760 = vmatprep.subr.bf16.mxu0 0
    %761 = vmatpush1.bf16.msra.mxu0 %v556
    %762 = vmatprep.subr.bf16.mxu0 0
    %763 = vmatpush1.bf16.msra.mxu0 %v557
    %764 = vmatprep.subr.bf16.mxu0 0
    %765 = vmatpush1.bf16.msra.mxu0 %v558
    %766 = vmatprep.subr.bf16.mxu0 0
    %767 = vmatpush1.bf16.msra.mxu0 %v559
    %768 = vmatprep.subr.bf16.mxu0 0
    %769 = vmatpush1.bf16.msra.mxu0 %v560
    %770 = vmatprep.subr.bf16.mxu0 0
    %771 = vmatpush1.bf16.msra.mxu0 %v561
    %772 = vmatprep.subr.bf16.mxu0 0
    %773 = vmatpush1.bf16.msra.mxu0 %v562
    %774 = vmatprep.subr.bf16.mxu0 0
    %775 = vmatpush1.bf16.msra.mxu0 %v563
    %776 = vmatprep.subr.bf16.mxu0 0
    %777 = vmatpush1.bf16.msra.mxu0 %v564
    %778 = vmatprep.subr.bf16.mxu0 0
    %779 = vmatpush1.bf16.msra.mxu0 %v565
    %780 = vmatprep.subr.bf16.mxu0 0
    %781 = vmatpush1.bf16.msra.mxu0 %v566
    %782 = vmatprep.subr.bf16.mxu0 0
    %783 = vmatpush1.bf16.msra.mxu0 %v567
    %784 = vmatprep.mubr.bf16.mxu0 %v247
    %785 = vmatmul.mubr.bf16.gmra.mrb[0].mxu0 %v246
    %v786 = vpop.f32.mrb[0].mxu0
    %v787 = vadd.f32 %v747, %v786
    %v788 = vpop.f32.mrb[0].mxu0
    %v789 = vpop.f32.mrb[0].mxu0
    %v790 = vpop.f32.mrb[0].mxu0
    %791 = vdwg.mxu0
    %v792 = vadd.f32 %v193, %v787
    %793 = vst [vmem:[#allocation2] sm:$0x3] %v792
    %v794 = vld [vmem:[#allocation3] sm:$0x3]
    %v795 = vld [vmem:[#allocation7] sm:$0xff]
    %v796 = vld [vmem:[#allocation7 + $0x8] sm:$0xff]
    %v799 = vcombine.high %v795, %v795
    %v801 = vunpack.c.l.s4 1983009808
    %v802 = vunpack.c.0.s8 %v801
    %v803 = vlaneseq
    %v804 = vshrl.u32 %v803, 7
    %v805 = vsub.s32 %v802, %v804
    %v806 = vrot.slane %v795, %v805
    %v808 = vunpack.c.l.s4 1983009808
    %v809 = vunpack.c.0.s8 %v808
    %v810 = vlaneseq
    %v811 = vshrl.u32 %v810, 7
    %v812 = vsub.s32 %v809, %v811
    %v813 = vrot.slane %v799, %v812
    %v814 = vcombine.high %v806, %v806
    %v815 = vcombine.high %v813, %v813
    %v816 = vcombine.high %v796, %v796
    %v818 = vunpack.c.l.s4 1983009808
    %v819 = vunpack.c.0.s8 %v818
    %v820 = vlaneseq
    %v821 = vshrl.u32 %v820, 7
    %v822 = vsub.s32 %v819, %v821
    %v823 = vrot.slane %v796, %v822
    %v825 = vunpack.c.l.s4 1983009808
    %v826 = vunpack.c.0.s8 %v825
    %v827 = vlaneseq
    %v828 = vshrl.u32 %v827, 7
    %v829 = vsub.s32 %v826, %v828
    %v830 = vrot.slane %v816, %v829
    %v831 = vcombine.high %v823, %v823
    %v832 = vcombine.high %v830, %v830
    %v841 = vpack.c.bf16 %v806, %v806
    %v842 = vpack.c.bf16 %v814, %v814
    %v843 = vpack.c.bf16 %v813, %v813
    %v844 = vpack.c.bf16 %v815, %v815
    %v845 = vpack.c.bf16 %v823, %v823
    %v846 = vpack.c.bf16 %v831, %v831
    %v847 = vpack.c.bf16 %v830, %v830
    %v848 = vpack.c.bf16 %v832, %v832
    %849 = vmatprep.subr.bf16.mxu0 0
    %850 = vmatpush1.bf16.msra.mxu0 %v504
    %851 = vmatprep.subr.bf16.mxu0 0
    %852 = vmatpush1.bf16.msra.mxu0 %v505
    %853 = vmatprep.subr.bf16.mxu0 0
    %854 = vmatpush1.bf16.msra.mxu0 %v506
    %855 = vmatprep.subr.bf16.mxu0 0
    %856 = vmatpush1.bf16.msra.mxu0 %v507
    %857 = vmatprep.subr.bf16.mxu0 0
    %858 = vmatpush1.bf16.msra.mxu0 %v508
    %859 = vmatprep.subr.bf16.mxu0 0
    %860 = vmatpush1.bf16.msra.mxu0 %v509
    %861 = vmatprep.subr.bf16.mxu0 0
    %862 = vmatpush1.bf16.msra.mxu0 %v510
    %863 = vmatprep.subr.bf16.mxu0 0
    %864 = vmatpush1.bf16.msra.mxu0 %v511
    %865 = vmatprep.subr.bf16.mxu0 0
    %866 = vmatpush1.bf16.msra.mxu0 %v512
    %867 = vmatprep.subr.bf16.mxu0 0
    %868 = vmatpush1.bf16.msra.mxu0 %v513
    %869 = vmatprep.subr.bf16.mxu0 0
    %870 = vmatpush1.bf16.msra.mxu0 %v514
    %871 = vmatprep.subr.bf16.mxu0 0
    %872 = vmatpush1.bf16.msra.mxu0 %v515
    %873 = vmatprep.subr.bf16.mxu0 0
    %874 = vmatpush1.bf16.msra.mxu0 %v516
    %875 = vmatprep.subr.bf16.mxu0 0
    %876 = vmatpush1.bf16.msra.mxu0 %v517
    %877 = vmatprep.subr.bf16.mxu0 0
    %878 = vmatpush1.bf16.msra.mxu0 %v518
    %879 = vmatprep.subr.bf16.mxu0 0
    %880 = vmatpush1.bf16.msra.mxu0 %v519
    %881 = vmatprep.mubr.bf16.mxu0 %v842
    %882 = vmatmul.mubr.bf16.gmra.mrb[0].mxu0 %v841
    %v883 = vpop.f32.mrb[0].mxu0
    %v884 = vadd.f32 0.0, %v883
    %v885 = vpop.f32.mrb[0].mxu0
    %v886 = vpop.f32.mrb[0].mxu0
    %v887 = vpop.f32.mrb[0].mxu0
    %888 = vdwg.mxu0
    %889 = vmatprep.subr.bf16.mxu0 0
    %890 = vmatpush1.bf16.msra.mxu0 %v520
    %891 = vmatprep.subr.bf16.mxu0 0
    %892 = vmatpush1.bf16.msra.mxu0 %v521
    %893 = vmatprep.subr.bf16.mxu0 0
    %894 = vmatpush1.bf16.msra.mxu0 %v522
    %895 = vmatprep.subr.bf16.mxu0 0
    %896 = vmatpush1.bf16.msra.mxu0 %v523
    %897 = vmatprep.subr.bf16.mxu0 0
    %898 = vmatpush1.bf16.msra.mxu0 %v524
    %899 = vmatprep.subr.bf16.mxu0 0
    %900 = vmatpush1.bf16.msra.mxu0 %v525
    %901 = vmatprep.subr.bf16.mxu0 0
    %902 = vmatpush1.bf16.msra.mxu0 %v526
    %903 = vmatprep.subr.bf16.mxu0 0
    %904 = vmatpush1.bf16.msra.mxu0 %v527
    %905 = vmatprep.subr.bf16.mxu0 0
    %906 = vmatpush1.bf16.msra.mxu0 %v528
    %907 = vmatprep.subr.bf16.mxu0 0
    %908 = vmatpush1.bf16.msra.mxu0 %v529
    %909 = vmatprep.subr.bf16.mxu0 0
    %910 = vmatpush1.bf16.msra.mxu0 %v530
    %911 = vmatprep.subr.bf16.mxu0 0
    %912 = vmatpush1.bf16.msra.mxu0 %v531
    %913 = vmatprep.subr.bf16.mxu0 0
    %914 = vmatpush1.bf16.msra.mxu0 %v532
    %915 = vmatprep.subr.bf16.mxu0 0
    %916 = vmatpush1.bf16.msra.mxu0 %v533
    %917 = vmatprep.subr.bf16.mxu0 0
    %918 = vmatpush1.bf16.msra.mxu0 %v534
    %919 = vmatprep.subr.bf16.mxu0 0
    %920 = vmatpush1.bf16.msra.mxu0 %v535
    %921 = vmatprep.mubr.bf16.mxu0 %v844
    %922 = vmatmul.mubr.bf16.gmra.mrb[0].mxu0 %v843
    %v923 = vpop.f32.mrb[0].mxu0
    %v924 = vadd.f32 %v884, %v923
    %v925 = vpop.f32.mrb[0].mxu0
    %v926 = vpop.f32.mrb[0].mxu0
    %v927 = vpop.f32.mrb[0].mxu0
    %928 = vdwg.mxu0
    %929 = vmatprep.subr.bf16.mxu0 0
    %930 = vmatpush1.bf16.msra.mxu0 %v536
    %931 = vmatprep.subr.bf16.mxu0 0
    %932 = vmatpush1.bf16.msra.mxu0 %v537
    %933 = vmatprep.subr.bf16.mxu0 0
    %934 = vmatpush1.bf16.msra.mxu0 %v538
    %935 = vmatprep.subr.bf16.mxu0 0
    %936 = vmatpush1.bf16.msra.mxu0 %v539
    %937 = vmatprep.subr.bf16.mxu0 0
    %938 = vmatpush1.bf16.msra.mxu0 %v540
    %939 = vmatprep.subr.bf16.mxu0 0
    %940 = vmatpush1.bf16.msra.mxu0 %v541
    %941 = vmatprep.subr.bf16.mxu0 0
    %942 = vmatpush1.bf16.msra.mxu0 %v542
    %943 = vmatprep.subr.bf16.mxu0 0
    %944 = vmatpush1.bf16.msra.mxu0 %v543
    %945 = vmatprep.subr.bf16.mxu0 0
    %946 = vmatpush1.bf16.msra.mxu0 %v544
    %947 = vmatprep.subr.bf16.mxu0 0
    %948 = vmatpush1.bf16.msra.mxu0 %v545
    %949 = vmatprep.subr.bf16.mxu0 0
    %950 = vmatpush1.bf16.msra.mxu0 %v546
    %951 = vmatprep.subr.bf16.mxu0 0
    %952 = vmatpush1.bf16.msra.mxu0 %v547
    %953 = vmatprep.subr.bf16.mxu0 0
    %954 = vmatpush1.bf16.msra.mxu0 %v548
    %955 = vmatprep.subr.bf16.mxu0 0
    %956 = vmatpush1.bf16.msra.mxu0 %v549
    %957 = vmatprep.subr.bf16.mxu0 0
    %958 = vmatpush1.bf16.msra.mxu0 %v550
    %959 = vmatprep.subr.bf16.mxu0 0
    %960 = vmatpush1.bf16.msra.mxu0 %v551
    %961 = vmatprep.mubr.bf16.mxu0 %v846
    %962 = vmatmul.mubr.bf16.gmra.mrb[0].mxu0 %v845
    %v963 = vpop.f32.mrb[0].mxu0
    %v964 = vadd.f32 %v924, %v963
    %v965 = vpop.f32.mrb[0].mxu0
    %v966 = vpop.f32.mrb[0].mxu0
    %v967 = vpop.f32.mrb[0].mxu0
    %968 = vdwg.mxu0
    %969 = vmatprep.subr.bf16.mxu0 0
    %970 = vmatpush1.bf16.msra.mxu0 %v552
    %971 = vmatprep.subr.bf16.mxu0 0
    %972 = vmatpush1.bf16.msra.mxu0 %v553
    %973 = vmatprep.subr.bf16.mxu0 0
    %974 = vmatpush1.bf16.msra.mxu0 %v554
    %975 = vmatprep.subr.bf16.mxu0 0
    %976 = vmatpush1.bf16.msra.mxu0 %v555
    %977 = vmatprep.subr.bf16.mxu0 0
    %978 = vmatpush1.bf16.msra.mxu0 %v556
    %979 = vmatprep.subr.bf16.mxu0 0
    %980 = vmatpush1.bf16.msra.mxu0 %v557
    %981 = vmatprep.subr.bf16.mxu0 0
    %982 = vmatpush1.bf16.msra.mxu0 %v558
    %983 = vmatprep.subr.bf16.mxu0 0
    %984 = vmatpush1.bf16.msra.mxu0 %v559
    %985 = vmatprep.subr.bf16.mxu0 0
    %986 = vmatpush1.bf16.msra.mxu0 %v560
    %987 = vmatprep.subr.bf16.mxu0 0
    %988 = vmatpush1.bf16.msra.mxu0 %v561
    %989 = vmatprep.subr.bf16.mxu0 0
    %990 = vmatpush1.bf16.msra.mxu0 %v562
    %991 = vmatprep.subr.bf16.mxu0 0
    %992 = vmatpush1.bf16.msra.mxu0 %v563
    %993 = vmatprep.subr.bf16.mxu0 0
    %994 = vmatpush1.bf16.msra.mxu0 %v564
    %995 = vmatprep.subr.bf16.mxu0 0
    %996 = vmatpush1.bf16.msra.mxu0 %v565
    %997 = vmatprep.subr.bf16.mxu0 0
    %998 = vmatpush1.bf16.msra.mxu0 %v566
    %999 = vmatprep.subr.bf16.mxu0 0
    %1000 = vmatpush1.bf16.msra.mxu0 %v567
    %1001 = vmatprep.mubr.bf16.mxu0 %v848
    %1002 = vmatmul.mubr.bf16.gmra.mrb[0].mxu0 %v847
    %v1003 = vpop.f32.mrb[0].mxu0
    %v1004 = vadd.f32 %v964, %v1003
    %v1005 = vpop.f32.mrb[0].mxu0
    %v1006 = vpop.f32.mrb[0].mxu0
    %v1007 = vpop.f32.mrb[0].mxu0
    %1008 = vdwg.mxu0
    %v1009 = vadd.f32 %v794, %v1004
    %1010 = vst [vmem:[#allocation3] sm:$0x3] %v1009
    // Predicated region
    $region38: #{tpu_custom_call.1} parent=1 // pred_check
      %p1011 = pneg %p59
    $region39: #{tpu_custom_call.1} parent=1 // pred_check_branch
      %1013 = sbr.rel (%p1011) target = $region41
    $region40: #{tpu_custom_call.1} parent=1 // pred_region
      %v1014 = vld [vmem:[%s3] sm:$0x1]
      %v1015 = vld [vmem:[#allocation2] sm:$0x3]
      %v1017 = vlaneseq
      %v1018 = vshrl.u32 %v1017, 7
      %v1019 = vsub.s32 0, %v1018
      %v1020 = vrot.slane %v1014, %v1019
      %v1022 = vadd.f32 %v1015, %v1020
      %v1023 = vld [vmem:[#allocation3] sm:$0x3]
      %v1024 = vadd.f32 %v1023, %v1020
      %v1025 = vlaneseq
      %v1026 = vand.u32 %v1025, 127
      %vm1027 = vcmp.lt.s32.totalorder %v1026, 32
      %v1028 = vsel %vm1027, %v1022, 0.0
      %v1029 = vmul.f32 %v1028, %v1028
      %vm1030 = vcmask 1041408
      %v1031 = vsel %vm1030, %v1029, 0.0
      %1032 = vadd.xlane.f32.xlu0 %v1031
      %v1033 = vpop.xlane.xlu0 %1032
      %v1034 = vmul.f32 %v1033, 0.5
      %v1035 = vrsqrt.pop %v1034
      %v1036 = vmul.f32 %v1034, %v1035
      %vm1037 = vcmp.eq.f32.partialorder %v1034, inf
      %v1038 = vsel %vm1037, %v1034, %v1036
      %vm1039 = vcmp.eq.f32.partialorder %v1034, 0.0
      %v1040 = vand.u32 %v1034, 2147483648
      %v1041 = vsel %vm1039, %v1040, %v1038
      %v1042 = vrcp.pop %v1041
      %v1043 = vmul.f32 1.0, %v1042
      %v1044 = vmul.f32 %v1028, %v1043
      %v1045 = vsel %vm1027, %v1024, 0.0
      %v1046 = vmul.f32 %v1045, %v1045
      %v1047 = vsel %vm1030, %v1046, 0.0
      %1048 = vadd.xlane.f32.xlu0 %v1047
      %v1049 = vpop.xlane.xlu0 %1048
      %v1050 = vmul.f32 %v1049, 0.5
      %v1051 = vrsqrt.pop %v1050
      %v1052 = vmul.f32 %v1050, %v1051
      %vm1053 = vcmp.eq.f32.partialorder %v1050, inf
      %v1054 = vsel %vm1053, %v1050, %v1052
      %vm1055 = vcmp.eq.f32.partialorder %v1050, 0.0
      %v1056 = vand.u32 %v1050, 2147483648
      %v1057 = vsel %vm1055, %v1056, %v1054
      %v1058 = vrcp.pop %v1057
      %v1059 = vmul.f32 1.0, %v1058
      %v1060 = vmul.f32 %v1045, %v1059
      %1061 = vmatprep.subr.mxu0 0.0
      %1062 = vmatpush1.xpose.msra.mxu0 %v1044
      %1063 = vmatprep.subr.mxu0 0.0
      %1064 = vmatpush1.xpose.msra.mxu0 0.0
      %1065 = vmatprep.subr.mxu0 0.0
      %1066 = vmatpush1.xpose.msra.mxu0 0.0
      %1067 = vmatprep.subr.mxu0 0.0
      %1068 = vmatpush1.xpose.msra.mxu0 0.0
      %1069 = vmatprep.subr.mxu0 0.0
      %1070 = vmatpush1.xpose.msra.mxu0 0.0
      %1071 = vmatprep.subr.mxu0 0.0
      %1072 = vmatpush1.xpose.msra.mxu0 0.0
      %1073 = vmatprep.subr.mxu0 0.0
      %1074 = vmatpush1.xpose.msra.mxu0 0.0
      %1075 = vmatprep.subr.mxu0 0.0
      %1076 = vmatpush1.xpose.msra.mxu0 0.0
      %1077 = vmatprep.subr.mxu0 0.0
      %1078 = vmatpush1.xpose.msra.mxu0 0.0
      %1079 = vmatprep.subr.mxu0 0.0
      %1080 = vmatpush1.xpose.msra.mxu0 0.0
      %1081 = vmatprep.subr.mxu0 0.0
      %1082 = vmatpush1.xpose.msra.mxu0 0.0
      %1083 = vmatprep.subr.mxu0 0.0
      %1084 = vmatpush1.xpose.msra.mxu0 0.0
      %1085 = vmatprep.subr.mxu0 0.0
      %1086 = vmatpush1.xpose.msra.mxu0 0.0
      %1087 = vmatprep.subr.mxu0 0.0
      %1088 = vmatpush1.xpose.msra.mxu0 0.0
      %1089 = vmatprep.subr.mxu0 0.0
      %1090 = vmatpush1.xpose.msra.mxu0 0.0
      %1091 = vmatprep.subr.mxu0 0.0
      %1092 = vmatpush1.xpose.msra.mxu0 0.0
      %1093 = vmatprep.subr.mxu0 0.0
      %1094 = vmatpush1.xpose.msra.mxu0 0.0
      %1095 = vmatprep.subr.mxu0 0.0
      %1096 = vmatpush1.xpose.msra.mxu0 0.0
      %1097 = vmatprep.subr.mxu0 0.0
      %1098 = vmatpush1.xpose.msra.mxu0 0.0
      %1099 = vmatprep.subr.mxu0 0.0
      %1100 = vmatpush1.xpose.msra.mxu0 0.0
      %1101 = vmatprep.subr.mxu0 0.0
      %1102 = vmatpush1.xpose.msra.mxu0 0.0
      %1103 = vmatprep.subr.mxu0 0.0
      %1104 = vmatpush1.xpose.msra.mxu0 0.0
      %1105 = vmatprep.subr.mxu0 0.0
      %1106 = vmatpush1.xpose.msra.mxu0 0.0
      %1107 = vmatprep.subr.mxu0 0.0
      %1108 = vmatpush1.xpose.msra.mxu0 0.0
      %1109 = vmatprep.subr.mxu0 0.0
      %1110 = vmatpush1.xpose.msra.mxu0 0.0
      %1111 = vmatprep.subr.mxu0 0.0
      %1112 = vmatpush1.xpose.msra.mxu0 0.0
      %1113 = vmatprep.subr.mxu0 0.0
      %1114 = vmatpush1.xpose.msra.mxu0 0.0
      %1115 = vmatprep.subr.mxu0 0.0
      %1116 = vmatpush1.xpose.msra.mxu0 0.0
      %1117 = vmatprep.subr.mxu0 0.0
      %1118 = vmatpush1.xpose.msra.mxu0 0.0
      %1119 = vmatprep.subr.mxu0 0.0
      %1120 = vmatpush1.xpose.msra.mxu0 0.0
      %1121 = vmatprep.subr.mxu0 0.0
      %1122 = vmatpush1.xpose.msra.mxu0 0.0
      %1123 = vmatprep.subr.mxu0 0.0
      %1124 = vmatpush1.xpose.msra.mxu0 0.0
      %1125 = vmatprep.mubr.f32.mxu0 0.0
      %1126 = vmatmul.mubr.f32.gmra.mrb[0].mxu0 %v1044
      %v1127 = vpop.f32.mrb[0].mxu0
      %v1128 = vadd.f32 0.0, %v1127
      %v1129 = vpop.f32.mrb[0].mxu0
      %1130 = vdwg.mxu0
      %v1131 = vmul.f32 %v1128, 1.442695
      %v1132 = vpow.pop %v1131
      %1133 = vmatprep.subr.mxu0 0.0
      %1134 = vmatpush1.xpose.msra.mxu0 %v1060
      %1135 = vmatprep.subr.mxu0 0.0
      %1136 = vmatpush1.xpose.msra.mxu0 0.0
      %1137 = vmatprep.subr.mxu0 0.0
      %1138 = vmatpush1.xpose.msra.mxu0 0.0
      %1139 = vmatprep.subr.mxu0 0.0
      %1140 = vmatpush1.xpose.msra.mxu0 0.0
      %1141 = vmatprep.subr.mxu0 0.0
      %1142 = vmatpush1.xpose.msra.mxu0 0.0
      %1143 = vmatprep.subr.mxu0 0.0
      %1144 = vmatpush1.xpose.msra.mxu0 0.0
      %1145 = vmatprep.subr.mxu0 0.0
      %1146 = vmatpush1.xpose.msra.mxu0 0.0
      %1147 = vmatprep.subr.mxu0 0.0
      %1148 = vmatpush1.xpose.msra.mxu0 0.0
      %1149 = vmatprep.subr.mxu0 0.0
      %1150 = vmatpush1.xpose.msra.mxu0 0.0
      %1151 = vmatprep.subr.mxu0 0.0
      %1152 = vmatpush1.xpose.msra.mxu0 0.0
      %1153 = vmatprep.subr.mxu0 0.0
      %1154 = vmatpush1.xpose.msra.mxu0 0.0
      %1155 = vmatprep.subr.mxu0 0.0
      %1156 = vmatpush1.xpose.msra.mxu0 0.0
      %1157 = vmatprep.subr.mxu0 0.0
      %1158 = vmatpush1.xpose.msra.mxu0 0.0
      %1159 = vmatprep.subr.mxu0 0.0
      %1160 = vmatpush1.xpose.msra.mxu0 0.0
      %1161 = vmatprep.subr.mxu0 0.0
      %1162 = vmatpush1.xpose.msra.mxu0 0.0
      %1163 = vmatprep.subr.mxu0 0.0
      %1164 = vmatpush1.xpose.msra.mxu0 0.0
      %1165 = vmatprep.subr.mxu0 0.0
      %1166 = vmatpush1.xpose.msra.mxu0 0.0
      %1167 = vmatprep.subr.mxu0 0.0
      %1168 = vmatpush1.xpose.msra.mxu0 0.0
      %1169 = vmatprep.subr.mxu0 0.0
      %1170 = vmatpush1.xpose.msra.mxu0 0.0
      %1171 = vmatprep.subr.mxu0 0.0
      %1172 = vmatpush1.xpose.msra.mxu0 0.0
      %1173 = vmatprep.subr.mxu0 0.0
      %1174 = vmatpush1.xpose.msra.mxu0 0.0
      %1175 = vmatprep.subr.mxu0 0.0
      %1176 = vmatpush1.xpose.msra.mxu0 0.0
      %1177 = vmatprep.subr.mxu0 0.0
      %1178 = vmatpush1.xpose.msra.mxu0 0.0
      %1179 = vmatprep.subr.mxu0 0.0
      %1180 = vmatpush1.xpose.msra.mxu0 0.0
      %1181 = vmatprep.subr.mxu0 0.0
      %1182 = vmatpush1.xpose.msra.mxu0 0.0
      %1183 = vmatprep.subr.mxu0 0.0
      %1184 = vmatpush1.xpose.msra.mxu0 0.0
      %1185 = vmatprep.subr.mxu0 0.0
      %1186 = vmatpush1.xpose.msra.mxu0 0.0
      %1187 = vmatprep.subr.mxu0 0.0
      %1188 = vmatpush1.xpose.msra.mxu0 0.0
      %1189 = vmatprep.subr.mxu0 0.0
      %1190 = vmatpush1.xpose.msra.mxu0 0.0
      %1191 = vmatprep.subr.mxu0 0.0
      %1192 = vmatpush1.xpose.msra.mxu0 0.0
      %1193 = vmatprep.subr.mxu0 0.0
      %1194 = vmatpush1.xpose.msra.mxu0 0.0
      %1195 = vmatprep.subr.mxu0 0.0
      %1196 = vmatpush1.xpose.msra.mxu0 0.0
      %1197 = vmatprep.mubr.f32.mxu0 0.0
      %1198 = vmatmul.mubr.f32.gmra.mrb[0].mxu0 %v1044
      %v1199 = vpop.f32.mrb[0].mxu0
      %v1200 = vadd.f32 0.0, %v1199
      %v1201 = vpop.f32.mrb[0].mxu0
      %1202 = vdwg.mxu0
      %v1203 = vmul.f32 %v1200, 1.442695
      %v1204 = vpow.pop %v1203
      %1205 = vmatprep.subr.mxu0 0.0
      %1206 = vmatpush1.xpose.msra.mxu0 %v1044
      %1207 = vmatprep.subr.mxu0 0.0
      %1208 = vmatpush1.xpose.msra.mxu0 0.0
      %1209 = vmatprep.subr.mxu0 0.0
      %1210 = vmatpush1.xpose.msra.mxu0 0.0
      %1211 = vmatprep.subr.mxu0 0.0
      %1212 = vmatpush1.xpose.msra.mxu0 0.0
      %1213 = vmatprep.subr.mxu0 0.0
      %1214 = vmatpush1.xpose.msra.mxu0 0.0
      %1215 = vmatprep.subr.mxu0 0.0
      %1216 = vmatpush1.xpose.msra.mxu0 0.0
      %1217 = vmatprep.subr.mxu0 0.0
      %1218 = vmatpush1.xpose.msra.mxu0 0.0
      %1219 = vmatprep.subr.mxu0 0.0
      %1220 = vmatpush1.xpose.msra.mxu0 0.0
      %1221 = vmatprep.subr.mxu0 0.0
      %1222 = vmatpush1.xpose.msra.mxu0 0.0
      %1223 = vmatprep.subr.mxu0 0.0
      %1224 = vmatpush1.xpose.msra.mxu0 0.0
      %1225 = vmatprep.subr.mxu0 0.0
      %1226 = vmatpush1.xpose.msra.mxu0 0.0
      %1227 = vmatprep.subr.mxu0 0.0
      %1228 = vmatpush1.xpose.msra.mxu0 0.0
      %1229 = vmatprep.subr.mxu0 0.0
      %1230 = vmatpush1.xpose.msra.mxu0 0.0
      %1231 = vmatprep.subr.mxu0 0.0
      %1232 = vmatpush1.xpose.msra.mxu0 0.0
      %1233 = vmatprep.subr.mxu0 0.0
      %1234 = vmatpush1.xpose.msra.mxu0 0.0
      %1235 = vmatprep.subr.mxu0 0.0
      %1236 = vmatpush1.xpose.msra.mxu0 0.0
      %1237 = vmatprep.subr.mxu0 0.0
      %1238 = vmatpush1.xpose.msra.mxu0 0.0
      %1239 = vmatprep.subr.mxu0 0.0
      %1240 = vmatpush1.xpose.msra.mxu0 0.0
      %1241 = vmatprep.subr.mxu0 0.0
      %1242 = vmatpush1.xpose.msra.mxu0 0.0
      %1243 = vmatprep.subr.mxu0 0.0
      %1244 = vmatpush1.xpose.msra.mxu0 0.0
      %1245 = vmatprep.subr.mxu0 0.0
      %1246 = vmatpush1.xpose.msra.mxu0 0.0
      %1247 = vmatprep.subr.mxu0 0.0
      %1248 = vmatpush1.xpose.msra.mxu0 0.0
      %1249 = vmatprep.subr.mxu0 0.0
      %1250 = vmatpush1.xpose.msra.mxu0 0.0
      %1251 = vmatprep.subr.mxu0 0.0
      %1252 = vmatpush1.xpose.msra.mxu0 0.0
      %1253 = vmatprep.subr.mxu0 0.0
      %1254 = vmatpush1.xpose.msra.mxu0 0.0
      %1255 = vmatprep.subr.mxu0 0.0
      %1256 = vmatpush1.xpose.msra.mxu0 0.0
      %1257 = vmatprep.subr.mxu0 0.0
      %1258 = vmatpush1.xpose.msra.mxu0 0.0
      %1259 = vmatprep.subr.mxu0 0.0
      %1260 = vmatpush1.xpose.msra.mxu0 0.0
      %1261 = vmatprep.subr.mxu0 0.0
      %1262 = vmatpush1.xpose.msra.mxu0 0.0
      %1263 = vmatprep.subr.mxu0 0.0
      %1264 = vmatpush1.xpose.msra.mxu0 0.0
      %1265 = vmatprep.subr.mxu0 0.0
      %1266 = vmatpush1.xpose.msra.mxu0 0.0
      %1267 = vmatprep.subr.mxu0 0.0
      %1268 = vmatpush1.xpose.msra.mxu0 0.0
      %1269 = vmatprep.mubr.f32.mxu0 0.0
      %1270 = vmatmul.mubr.f32.gmra.mrb[0].mxu0 %v1060
      %v1271 = vpop.f32.mrb[0].mxu0
      %v1272 = vadd.f32 0.0, %v1271
      %v1273 = vpop.f32.mrb[0].mxu0
      %1274 = vdwg.mxu0
      %v1275 = vmul.f32 %v1272, 1.442695
      %v1276 = vpow.pop %v1275
      %1277 = vmatprep.subr.mxu0 0.0
      %1278 = vmatpush1.xpose.msra.mxu0 %v1060
      %1279 = vmatprep.subr.mxu0 0.0
      %1280 = vmatpush1.xpose.msra.mxu0 0.0
      %1281 = vmatprep.subr.mxu0 0.0
      %1282 = vmatpush1.xpose.msra.mxu0 0.0
      %1283 = vmatprep.subr.mxu0 0.0
      %1284 = vmatpush1.xpose.msra.mxu0 0.0
      %1285 = vmatprep.subr.mxu0 0.0
      %1286 = vmatpush1.xpose.msra.mxu0 0.0
      %1287 = vmatprep.subr.mxu0 0.0
      %1288 = vmatpush1.xpose.msra.mxu0 0.0
      %1289 = vmatprep.subr.mxu0 0.0
      %1290 = vmatpush1.xpose.msra.mxu0 0.0
      %1291 = vmatprep.subr.mxu0 0.0
      %1292 = vmatpush1.xpose.msra.mxu0 0.0
      %1293 = vmatprep.subr.mxu0 0.0
      %1294 = vmatpush1.xpose.msra.mxu0 0.0
      %1295 = vmatprep.subr.mxu0 0.0
      %1296 = vmatpush1.xpose.msra.mxu0 0.0
      %1297 = vmatprep.subr.mxu0 0.0
      %1298 = vmatpush1.xpose.msra.mxu0 0.0
      %1299 = vmatprep.subr.mxu0 0.0
      %1300 = vmatpush1.xpose.msra.mxu0 0.0
      %1301 = vmatprep.subr.mxu0 0.0
      %1302 = vmatpush1.xpose.msra.mxu0 0.0
      %1303 = vmatprep.subr.mxu0 0.0
      %1304 = vmatpush1.xpose.msra.mxu0 0.0
      %1305 = vmatprep.subr.mxu0 0.0
      %1306 = vmatpush1.xpose.msra.mxu0 0.0
      %1307 = vmatprep.subr.mxu0 0.0
      %1308 = vmatpush1.xpose.msra.mxu0 0.0
      %1309 = vmatprep.subr.mxu0 0.0
      %1310 = vmatpush1.xpose.msra.mxu0 0.0
      %1311 = vmatprep.subr.mxu0 0.0
      %1312 = vmatpush1.xpose.msra.mxu0 0.0
      %1313 = vmatprep.subr.mxu0 0.0
      %1314 = vmatpush1.xpose.msra.mxu0 0.0
      %1315 = vmatprep.subr.mxu0 0.0
      %1316 = vmatpush1.xpose.msra.mxu0 0.0
      %1317 = vmatprep.subr.mxu0 0.0
      %1318 = vmatpush1.xpose.msra.mxu0 0.0
      %1319 = vmatprep.subr.mxu0 0.0
      %1320 = vmatpush1.xpose.msra.mxu0 0.0
      %1321 = vmatprep.subr.mxu0 0.0
      %1322 = vmatpush1.xpose.msra.mxu0 0.0
      %1323 = vmatprep.subr.mxu0 0.0
      %1324 = vmatpush1.xpose.msra.mxu0 0.0
      %1325 = vmatprep.subr.mxu0 0.0
      %1326 = vmatpush1.xpose.msra.mxu0 0.0
      %1327 = vmatprep.subr.mxu0 0.0
      %1328 = vmatpush1.xpose.msra.mxu0 0.0
      %1329 = vmatprep.subr.mxu0 0.0
      %1330 = vmatpush1.xpose.msra.mxu0 0.0
      %1331 = vmatprep.subr.mxu0 0.0
      %1332 = vmatpush1.xpose.msra.mxu0 0.0
      %1333 = vmatprep.subr.mxu0 0.0
      %1334 = vmatpush1.xpose.msra.mxu0 0.0
      %1335 = vmatprep.subr.mxu0 0.0
      %1336 = vmatpush1.xpose.msra.mxu0 0.0
      %1337 = vmatprep.subr.mxu0 0.0
      %1338 = vmatpush1.xpose.msra.mxu0 0.0
      %1339 = vmatprep.subr.mxu0 0.0
      %1340 = vmatpush1.xpose.msra.mxu0 0.0
      %1341 = vmatprep.mubr.f32.mxu0 0.0
      %1342 = vmatmul.mubr.f32.gmra.mrb[0].mxu0 %v1060
      %v1343 = vpop.f32.mrb[0].mxu0
      %v1344 = vadd.f32 0.0, %v1343
      %v1345 = vpop.f32.mrb[0].mxu0
      %1346 = vdwg.mxu0
      %v1347 = vmul.f32 %v1344, 1.442695
      %v1348 = vpow.pop %v1347
      %vm1349 = vcmask 9216
      %v1350 = vsel %vm1349, %v1132, 0.0
      %1351 = vadd.xlane.f32.xlu0 %v1350
      %v1352 = vpop.xlane.xlu0 %1351
      %v1353 = vsel %vm1349, %v1204, 0.0
      %1354 = vadd.xlane.f32.xlu0 %v1353
      %v1355 = vpop.xlane.xlu0 %1354
      %v1356 = vadd.f32 %v1352, %v1355
      %v1357 = vsub.f32 %v1356, 7.389056
      %v1358 = vsel %vm1349, %v1348, 0.0
      %1359 = vadd.xlane.f32.xlu0 %v1358
      %v1360 = vpop.xlane.xlu0 %1359
      %v1361 = vsel %vm1349, %v1276, 0.0
      %1362 = vadd.xlane.f32.xlu0 %v1361
      %v1363 = vpop.xlane.xlu0 %1362
      %v1364 = vadd.f32 %v1360, %v1363
      %v1365 = vsub.f32 %v1364, 7.389056
      %v1366 = vmul.f32 %v1044, %v1060
      %v1367 = vsel %vm1030, %v1366, 0.0
      %1368 = vadd.xlane.f32.xlu0 %v1367
      %v1369 = vpop.xlane.xlu0 %1368
      %v1370 = vmul.f32 %v1369, 1.442695
      %v1371 = vpow.pop %v1370
      %v1372 = vrcp.pop %v1357
      %v1373 = vmul.f32 %v1371, %v1372
      %v1374 = vadd.f32 %v1373, 1e-08
      %v1375 = vlog2.pop %v1374
      %v1376 = vmul.f32 %v1375, 0.6931472
      %v1377 = vsub.f32 0.0, %v1376
      %v1378 = vrcp.pop %v1365
      %v1379 = vmul.f32 %v1371, %v1378
      %v1380 = vadd.f32 %v1379, 1e-08
      %v1381 = vlog2.pop %v1380
      %v1382 = vmul.f32 %v1381, 0.6931472
      %v1383 = vsub.f32 %v1377, %v1382
      %v1384 = vsel %vm1030, %v1383, 0.0
      %v1385 = vrot.slane %v1384, 4
      %v1386 = vadd.f32 %v1384, %v1385
      %v1387 = vrot.slane %v1386, 2
      %v1388 = vadd.f32 %v1386, %v1387
      %v1389 = vrot.slane %v1388, 1
      %v1390 = vadd.f32 %v1388, %v1389
      %v1391 = vrcp.pop 4.0
      %v1392 = vmul.f32 %v1390, %v1391
      %vm1393 = vcmp.ge.s32.totalorder %v1026, 32
      %vm1394 = vcmp.lt.s32.totalorder %v1026, 36
      %vm1395 = vmand %vm1393, %vm1394
      %v1396 = vld [vmem:[%s4] sm:$0x3]
      %v1397 = vadd.s32 %v1396, 32
      %1398 = vset.pattern.permute.xlu0 0
      %1399 = vperm.xlu0 %1398, %v1397
      %v1400 = vpop.permute.xlu0 %1399
      %vm1401 = vcmp.eq.s32.totalorder %v1026, %v1400
      %v1402 = vsel %vm1401, 1, 0
      %v1403 = vcvt.s32.f32 %v1402
      %v1404 = vsel %vm1395, %v1022, -1e+30
      %v1405 = vsel %vm1030, %v1404, -inf
      %1406 = vmax.xlane.f32.xlu0 %v1405
      %v1407 = vpop.xlane.xlu0 %1406
      %v1408 = vsub.f32 %v1404, %v1407
      %v1409 = vmul.f32 %v1408, 1.442695
      %v1410 = vpow.pop %v1409
      %v1411 = vsel %vm1030, %v1410, 0.0
      %1412 = vadd.xlane.f32.xlu0 %v1411
      %v1413 = vpop.xlane.xlu0 %1412
      %v1414 = vlog2.pop %v1413
      %v1415 = vmul.f32 %v1414, 0.6931472
      %v1416 = vadd.f32 %v1415, %v1407
      %v1417 = vmul.f32 %v1403, %v1022
      %v1418 = vsel %vm1030, %v1417, 0.0
      %1419 = vadd.xlane.f32.xlu0 %v1418
      %v1420 = vpop.xlane.xlu0 %1419
      %v1421 = vsub.f32 %v1416, %v1420
      %v1422 = vsel %vm1030, %v1421, 0.0
      %v1423 = vrot.slane %v1422, 4
      %v1424 = vadd.f32 %v1422, %v1423
      %v1425 = vrot.slane %v1424, 2
      %v1426 = vadd.f32 %v1424, %v1425
      %v1427 = vrot.slane %v1426, 1
      %v1428 = vadd.f32 %v1426, %v1427
      %v1429 = vrcp.pop 2.0
      %v1430 = vmul.f32 %v1428, %v1429
      %v1431 = vsel %vm1395, %v1024, -1e+30
      %v1432 = vsel %vm1030, %v1431, -inf
      %1433 = vmax.xlane.f32.xlu0 %v1432
      %v1434 = vpop.xlane.xlu0 %1433
      %v1435 = vsub.f32 %v1431, %v1434
      %v1436 = vmul.f32 %v1435, 1.442695
      %v1437 = vpow.pop %v1436
      %v1438 = vsel %vm1030, %v1437, 0.0
      %1439 = vadd.xlane.f32.xlu0 %v1438
      %v1440 = vpop.xlane.xlu0 %1439
      %v1441 = vlog2.pop %v1440
      %v1442 = vmul.f32 %v1441, 0.6931472
      %v1443 = vadd.f32 %v1442, %v1434
      %v1444 = vmul.f32 %v1403, %v1024
      %v1445 = vsel %vm1030, %v1444, 0.0
      %1446 = vadd.xlane.f32.xlu0 %v1445
      %v1447 = vpop.xlane.xlu0 %1446
      %v1448 = vsub.f32 %v1443, %v1447
      %v1449 = vsel %vm1030, %v1448, 0.0
      %v1450 = vrot.slane %v1449, 4
      %v1451 = vadd.f32 %v1449, %v1450
      %v1452 = vrot.slane %v1451, 2
      %v1453 = vadd.f32 %v1451, %v1452
      %v1454 = vrot.slane %v1453, 1
      %v1455 = vadd.f32 %v1453, %v1454
      %v1456 = vmul.f32 %v1455, %v1429
      %v1457 = vadd.f32 %v1430, %v1456
      %v1458 = vmul.f32 %v1457, 0.2
      %v1459 = vadd.f32 %v1392, %v1458
      %vm1460 = vcmask 0
      %1461 = vst.msk [vmem:[#allocation10] sm:$0x1] %vm1460, %v1459
    $region41: #{tpu_custom_call.1} parent=1 // pred_fallthru
      _
    // Predicated region
    $region42: #{tpu_custom_call.1} parent=1 // pred_check
      _
    $region43: #{tpu_custom_call.1} parent=1 // pred_check_branch
      %1463 = sbr.rel (0) target = $region45
    $region44: #{tpu_custom_call.1} parent=1 // pred_region
      %s1465 = ssub.s32 16, 16
      %1466 = vsyncadd [#allocation6], %s1465
      %s1468 = sshll.u32 [#allocation10], 4
      %s1469 = int_to_ptr.vmem [resolvable:$true] %s1468
      %1471 = dma.vmem_to_hbm [thread:$0]  %s1469, 16, %s5, [#allocation6]
    $region45: #{tpu_custom_call.1} parent=1 // pred_fallthru
      _
    // Predicated region
    $region46: #{tpu_custom_call.1} parent=1 // pred_check
      _
    $region47: #{tpu_custom_call.1} parent=1 // pred_check_branch
      %1473 = sbr.rel (0) target = $region49
    $region48: #{tpu_custom_call.1} parent=1 // pred_region
      %1474 = dma.done [#allocation6], 16
    $region49: #{tpu_custom_call.1} parent=1 // pred_fallthru
      _
    %1475 = vsyncpa [#allocation5], 1
    %1476 = vsyncpa [#allocation8], 1
    %1477 = vsyncpa [#allocation6], 1

</llo_original>
